<compile_context>
chip_gen: v6e
topology: v6e:2x2x1
jax: 0.10.0
libtpu: 0.0.40
codegen_flags: <defaults>
</compile_context>

<pallas_src>
import math
from functools import partial

import jax
import jax.numpy as jnp
import numpy as np
from jax.experimental import pallas as pl
from jax.experimental.pallas import tpu as pltpu


_SUBLANE = 16   # covers bf16 sublane packing (f32 only needs 8)
_LANE = 128


def _round_up(v, m):
    return ((v + m - 1) // m) * m


def _vmem_limit_bytes():
    # v5e/v6e: 128 MiB physical VMEM per core, v7x: 64 MiB.  Spend ~3/4 of
    # whatever this chip has (=> ~96 MiB on v5e/v6e, ~48 MiB on v7x) so big
    # adj tiles fit without overflowing v7x's smaller budget.
    try:
        cap = getattr(pltpu.get_tpu_info(), "vmem_capacity_bytes", None)
        if cap:
            return int(min(cap * 3 // 4, 96 * 1024 * 1024))
    except Exception:
        pass
    return 64 * 1024 * 1024


def _gcn_edge_concat_kernel(adj_ref, x_ref, y_ref, sw_ref,
                            gamma_ref, beta_ref, bias_ref,
                            out_ref, acc_ref, ssum_ref, *, n_edges):
    k = pl.program_id(1)

    @pl.when(k == 0)
    def _init():
        acc_ref[...] = jnp.zeros_like(acc_ref)
        ssum_ref[...] = jnp.zeros_like(ssum_ref)

    # Lane-dense per-edge accumulation:  out_acc += adj_e @ (x @ W_e).
    # Every dot has a 128-multiple output width, so MXU results and the f32
    # accumulator stores are full-width on all generations (no vst.msk RMW).
    adj_sum = adj_ref[0]
    acc_ref[...] += jnp.dot(adj_ref[0], y_ref[0],
                            preferred_element_type=jnp.float32)
    for e in range(1, n_edges):
        adj_e = adj_ref[e]
        acc_ref[...] += jnp.dot(adj_e, y_ref[e],
                                preferred_element_type=jnp.float32)
        adj_sum = adj_sum + adj_e

    # LayerNorm branch:  sum_e (adj_e @ x) == (sum_e adj_e) @ x
    # -> a single narrow dot per k step instead of E.
    ssum_ref[...] += jnp.dot(adj_sum, x_ref[...],
                             preferred_element_type=jnp.float32)

    @pl.when(k == pl.num_programs(1) - 1)
    def _finalize():
        # LayerNorm(sum_e support_e), eps=1e-6, affine -- f32 epilogue.
        s = ssum_ref[...]
        mean = jnp.mean(s, axis=-1, keepdims=True)
        c = s - mean
        var = jnp.mean(c * c, axis=-1, keepdims=True)
        s_ln = c * jax.lax.rsqrt(var + 1e-6)
        s_ln = s_ln * gamma_ref[...] + beta_ref[...]
        # Small epilogue matmul with bf16 operands (f32 accumulation).
        share = jnp.dot(s_ln.astype(jnp.bfloat16), sw_ref[...],
                        preferred_element_type=jnp.float32)
        out_ref[...] = ((acc_ref[...] + share) * 0.5
                        + bias_ref[...]).astype(out_ref.dtype)


def gcn_edge_concat(adj, x, weight, share_weight, ln_gamma, ln_beta, bias,
                    *, tm=256, tk=512, out_dtype=jnp.float32):
    """adj: [E, N, N] dense per-edge-type adjacencies (pre-store in bf16 with
    tile-aligned N for the zero-copy fast path), x: [N, F_in],
    weight: [E*F_in, F_out] (row blocks ordered like torch.cat([adj_e @ x], 1)),
    share_weight: [F_in, F_out], ln_gamma / ln_beta: [F_in], bias: [F_out]."""
    e, n, n2 = adj.shape
    assert n == n2
    f_in = x.shape[-1]
    f_out = weight.shape[-1]
    assert weight.shape[0] == e * f_in
    assert share_weight.shape == (f_in, f_out)

    f_out_p = _round_up(f_out, _LANE)            # lane-dense output stores

    # Row (output) tiling: keep >= 2 row tiles when possible so both v7x
    # TensorCores get fed through the "parallel" row axis.
    n_al = _round_up(n, _SUBLANE)
    if n_al <= tm:
        tm_eff = _round_up(-(-n_al // 2), _SUBLANE) if n_al >= 2 * _SUBLANE else n_al
    else:
        tm_eff = tm
    n_m = _round_up(n, tm_eff)

    # Contraction tiling: wide 512 tiles (adj stream is HBM-bound), or the
    # full unpadded dim when N is small.
    if n <= tk:
        tk_eff, n_k = n, n
    else:
        tk_eff, n_k = tk, _round_up(n, tk)

    # Dominant HBM stream: adj in bf16.  Only copy when a cast or padding is
    # actually needed -- with pre-stored bf16 adj and aligned N this is
    # zero-copy (a wrapper pad/cast pass would cost ~3x the kernel's own adj
    # traffic on this memory-bound kernel).
    adj_bf = adj if adj.dtype == jnp.bfloat16 else adj.astype(jnp.bfloat16)
    if (n_m, n_k) != (n, n):
        adj_bf = jnp.zeros((e, n_m, n_k), jnp.bfloat16).at[:, :n, :n].set(adj_bf)

    x_bf = x.astype(jnp.bfloat16)
    if n_k != n:
        x_bf = jnp.zeros((n_k, f_in), jnp.bfloat16).at[:n].set(x_bf)

    # "Project-first" prologue: y_e = x @ W_e (tiny), streamed in bf16.
    w3 = weight.astype(jnp.float32).reshape(e, f_in, f_out)
    y = jnp.einsum("nf,efo->eno", x.astype(jnp.float32), w3)
    y_bf = jnp.zeros((e, n_k, f_out_p), jnp.bfloat16
                     ).at[:, :n, :f_out].set(y.astype(jnp.bfloat16))

    sw_bf = jnp.zeros((f_in, f_out_p), jnp.bfloat16
                      ).at[:, :f_out].set(share_weight.astype(jnp.bfloat16))
    bias_p = jnp.zeros((1, f_out_p), jnp.float32
                       ).at[0, :f_out].set(bias.astype(jnp.float32))
    gamma2 = ln_gamma.reshape(1, f_in).astype(jnp.float32)
    beta2 = ln_beta.reshape(1, f_in).astype(jnp.float32)

    grid = (n_m // tm_eff, n_k // tk_eff)
    kernel = partial(_gcn_edge_concat_kernel, n_edges=e)

    n_row_tiles = grid[0]
    cost = pl.CostEstimate(
        flops=(2 * e * n_m * n_k * f_out_p        # adj_e @ y_e
               + 2 * n_m * n_k * f_in             # (sum_e adj_e) @ x
               + 2 * n_m * f_in * f_out_p),       # LN(.) @ W_share
        transcendentals=n_m,                      # one rsqrt per row
        bytes_accessed=(adj_bf.size * 2
                        + n_row_tiles * (x_bf.size + y_bf.size) * 2
                        + sw_bf.size * 2
                        + (bias_p.size + gamma2.size + beta2.size) * 4
                        + n_m * f_out_p * np.dtype(out_dtype).itemsize),
    )

    out = pl.pallas_call(
        kernel,
        out_shape=jax.ShapeDtypeStruct((n_m, f_out_p), out_dtype),
        grid_spec=pltpu.PrefetchScalarGridSpec(
            num_scalar_prefetch=0,
            grid=grid,
            in_specs=[
                pl.BlockSpec((e, tm_eff, tk_eff), lambda i, k: (0, i, k)),   # adj
                pl.BlockSpec((tk_eff, f_in), lambda i, k: (k, 0)),           # x
                pl.BlockSpec((e, tk_eff, f_out_p), lambda i, k: (0, k, 0)),  # y = x@W_e
                pl.BlockSpec((f_in, f_out_p), lambda i, k: (0, 0)),          # W_share
                pl.BlockSpec((1, f_in), lambda i, k: (0, 0)),                # gamma
                pl.BlockSpec((1, f_in), lambda i, k: (0, 0)),                # beta
                pl.BlockSpec((1, f_out_p), lambda i, k: (0, 0)),             # bias
            ],
            out_specs=pl.BlockSpec((tm_eff, f_out_p), lambda i, k: (i, 0)),
            scratch_shapes=[
                pltpu.VMEM((tm_eff, f_out_p), jnp.float32),   # out accumulator
                pltpu.VMEM((tm_eff, f_in), jnp.float32),      # sum_e support_e
            ],
        ),
        compiler_params=pltpu.CompilerParams(
            dimension_semantics=("parallel", "arbitrary"),
            vmem_limit_bytes=_vmem_limit_bytes(),
        ),
        cost_estimate=cost,
    )(adj_bf, x_bf, y_bf, sw_bf, gamma2, beta2, bias_p)

    return out[:n, :f_out]


def _reference(adj, x, weight, share_weight, ln_gamma, ln_beta, bias):
    supports = [adj[i] @ x for i in range(adj.shape[0])]
    support = jnp.concatenate(supports, axis=1)
    s_sum = supports[0]
    for s in supports[1:]:
        s_sum = s_sum + s
    mean = jnp.mean(s_sum, axis=-1, keepdims=True)
    var = jnp.mean((s_sum - mean) ** 2, axis=-1, keepdims=True)
    s_ln = (s_sum - mean) / jnp.sqrt(var + 1e-6) * ln_gamma + ln_beta
    return (support @ weight + s_ln @ share_weight) / 2 + bias


if __name__ == "__main__":
    E, F_IN, F_OUT = 3, 32, 32
    root = jax.random.PRNGKey(0)

    def run_case(n, adj_dtype):
        keys = jax.random.split(jax.random.fold_in(root, n), 5)
        stdv = 1.0 / math.sqrt(F_OUT)   # reset_parameters: uniform(-stdv, stdv)
        adj_f32 = jax.random.uniform(keys[0], (E, n, n), jnp.float32)
        x = jax.random.normal(keys[1], (n, F_IN), jnp.float32)
        weight = jax.random.uniform(keys[2], (E * F_IN, F_OUT), jnp.float32,
                                    minval=-stdv, maxval=stdv)
        share_weight = jax.random.uniform(keys[3], (F_IN, F_OUT), jnp.float32,
                                          minval=-stdv, maxval=stdv)
        bias = jax.random.uniform(keys[4], (F_OUT,), jnp.float32,
                                  minval=-stdv, maxval=stdv)
        ln_gamma = jnp.ones((F_IN,), jnp.float32)
        ln_beta = jnp.zeros((F_IN,), jnp.float32)

        out = gcn_edge_concat(adj_f32.astype(adj_dtype), x, weight,
                              share_weight, ln_gamma, ln_beta, bias)
        out = jax.block_until_ready(out)

        ref = _reference(adj_f32, x, weight, share_weight,
                         ln_gamma, ln_beta, bias)
        # Tolerance covers bf16 streaming of adj / projected features
        # (all accumulation stays f32).
        np.testing.assert_allclose(np.asarray(out), np.asarray(ref),
                                   rtol=2e-2, atol=1e-1)

    # Case 1: bf16-stored adjacency, tile-aligned N -> zero-copy fast path,
    # (2, 1) grid with both row tiles available for v7x megacore.
    run_case(256, jnp.bfloat16)
    # Case 2: f32 adjacency, ragged N -> exercises the pad/cast fallback.
    run_case(200, jnp.float32)
    print("KERNEL_OK")
</pallas_src>

<mosaic_0001>
module attributes {stable_mosaic.version = 11 : i64} {
  func.func @_gcn_edge_concat_kernel(%arg0: i32, %arg1: i32, %arg2: memref<3x128x256xbf16, #tpu.memory_space<vmem>>, %arg3: memref<256x32xbf16, #tpu.memory_space<vmem>>, %arg4: memref<3x256x128xbf16, #tpu.memory_space<vmem>>, %arg5: memref<32x128xbf16, #tpu.memory_space<vmem>>, %arg6: memref<1x32xf32, #tpu.memory_space<vmem>>, %arg7: memref<1x32xf32, #tpu.memory_space<vmem>>, %arg8: memref<1x128xf32, #tpu.memory_space<vmem>>, %arg9: memref<128x128xf32, #tpu.memory_space<vmem>>, %arg10: memref<128x128xf32, #tpu.memory_space<vmem>>, %arg11: memref<128x32xf32, #tpu.memory_space<vmem>>) attributes {dimension_semantics = [#tpu.dimension_semantics<parallel>, #tpu.dimension_semantics<arbitrary>], iteration_bounds = array<i64: 2, 1>, scalar_prefetch = 0 : i64, scratch_operands = 2 : i64, tpu.core_type = #tpu.core_type<tc>, window_params = [{transform_indices = @transform_0, window_bounds = array<i64: 3, 128, 256>}, {transform_indices = @transform_1, window_bounds = array<i64: 256, 32>}, {transform_indices = @transform_2, window_bounds = array<i64: 3, 256, 128>}, {pipeline_mode = #tpu.pipeline_mode<synchronous>, transform_indices = @transform_3, window_bounds = array<i64: 32, 128>}, {pipeline_mode = #tpu.pipeline_mode<synchronous>, transform_indices = @transform_4, window_bounds = array<i64: 1, 32>}, {pipeline_mode = #tpu.pipeline_mode<synchronous>, transform_indices = @transform_5, window_bounds = array<i64: 1, 32>}, {pipeline_mode = #tpu.pipeline_mode<synchronous>, transform_indices = @transform_6, window_bounds = array<i64: 1, 128>}, {transform_indices = @transform_7, window_bounds = array<i64: 128, 128>}]} {
    %c0_i32 = arith.constant 0 : i32
    %0 = arith.cmpi eq, %arg1, %c0_i32 : i32
    %1 = arith.extui %0 : i1 to i32
    %c0_i32_0 = arith.constant 0 : i32
    %2 = arith.cmpi ne, %1, %c0_i32_0 : i32
    scf.if %2 {
      %cst_42 = arith.constant 0.000000e+00 : f32
      %39 = vector.broadcast %cst_42 : f32 to vector<128x128xf32>
      %c0_43 = arith.constant 0 : index
      %c0_44 = arith.constant 0 : index
      %40 = vector.load %arg10[%c0_43, %c0_44] : memref<128x128xf32, #tpu.memory_space<vmem>>, vector<128x128xf32>
      tpu.vector_store %arg10[%c0_43, %c0_44], %39 {strides = array<i32>} : memref<128x128xf32, #tpu.memory_space<vmem>>, vector<128x128xf32>,
      %cst_45 = arith.constant 0.000000e+00 : f32
      %41 = vector.broadcast %cst_45 : f32 to vector<128x32xf32>
      %c0_46 = arith.constant 0 : index
      %c0_47 = arith.constant 0 : index
      %42 = vector.load %arg11[%c0_46, %c0_47] : memref<128x32xf32, #tpu.memory_space<vmem>>, vector<128x32xf32>
      tpu.vector_store %arg11[%c0_46, %c0_47], %41 {strides = array<i32>} : memref<128x32xf32, #tpu.memory_space<vmem>>, vector<128x32xf32>,
    } else {
    }
    %c0 = arith.constant 0 : index
    %c0_1 = arith.constant 0 : index
    %c0_2 = arith.constant 0 : index
    %3 = vector.load %arg2[%c0, %c0_1, %c0_2] : memref<3x128x256xbf16, #tpu.memory_space<vmem>>, vector<1x128x256xbf16>
    %4 = vector.shape_cast %3 : vector<1x128x256xbf16> to vector<128x256xbf16>
    %c0_3 = arith.constant 0 : index
    %c0_4 = arith.constant 0 : index
    %5 = vector.load %arg10[%c0_3, %c0_4] : memref<128x128xf32, #tpu.memory_space<vmem>>, vector<128x128xf32>
    %c0_5 = arith.constant 0 : index
    %c0_6 = arith.constant 0 : index
    %c0_7 = arith.constant 0 : index
    %6 = vector.load %arg2[%c0_5, %c0_6, %c0_7] : memref<3x128x256xbf16, #tpu.memory_space<vmem>>, vector<1x128x256xbf16>
    %7 = vector.shape_cast %6 : vector<1x128x256xbf16> to vector<128x256xbf16>
    %c0_8 = arith.constant 0 : index
    %c0_9 = arith.constant 0 : index
    %c0_10 = arith.constant 0 : index
    %8 = vector.load %arg4[%c0_8, %c0_9, %c0_10] : memref<3x256x128xbf16, #tpu.memory_space<vmem>>, vector<1x256x128xbf16>
    %9 = vector.shape_cast %8 : vector<1x256x128xbf16> to vector<256x128xbf16>
    %cst = arith.constant dense<0.000000e+00> : vector<128x128xf32>
    %10 = tpu.matmul %7, %9, %cst {dimension_numbers = #tpu.dot_dimension_numbers<[1], [0], [0], [1], [0, 0, 1, 1], [], []>} : vector<128x256xbf16>, vector<256x128xbf16>, vector<128x128xf32> -> vector<128x128xf32>
    %11 = arith.addf %5, %10 : vector<128x128xf32>
    %c0_11 = arith.constant 0 : index
    %c0_12 = arith.constant 0 : index
    %12 = vector.load %arg10[%c0_11, %c0_12] : memref<128x128xf32, #tpu.memory_space<vmem>>, vector<128x128xf32>
    tpu.vector_store %arg10[%c0_11, %c0_12], %11 {strides = array<i32>} : memref<128x128xf32, #tpu.memory_space<vmem>>, vector<128x128xf32>,
    %c1 = arith.constant 1 : index
    %c0_13 = arith.constant 0 : index
    %c0_14 = arith.constant 0 : index
    %13 = vector.load %arg2[%c1, %c0_13, %c0_14] : memref<3x128x256xbf16, #tpu.memory_space<vmem>>, vector<1x128x256xbf16>
    %14 = vector.shape_cast %13 : vector<1x128x256xbf16> to vector<128x256xbf16>
    %c0_15 = arith.constant 0 : index
    %c0_16 = arith.constant 0 : index
    %15 = vector.load %arg10[%c0_15, %c0_16] : memref<128x128xf32, #tpu.memory_space<vmem>>, vector<128x128xf32>
    %c1_17 = arith.constant 1 : index
    %c0_18 = arith.constant 0 : index
    %c0_19 = arith.constant 0 : index
    %16 = vector.load %arg4[%c1_17, %c0_18, %c0_19] : memref<3x256x128xbf16, #tpu.memory_space<vmem>>, vector<1x256x128xbf16>
    %17 = vector.shape_cast %16 : vector<1x256x128xbf16> to vector<256x128xbf16>
    %cst_20 = arith.constant dense<0.000000e+00> : vector<128x128xf32>
    %18 = tpu.matmul %14, %17, %cst_20 {dimension_numbers = #tpu.dot_dimension_numbers<[1], [0], [0], [1], [0, 0, 1, 1], [], []>} : vector<128x256xbf16>, vector<256x128xbf16>, vector<128x128xf32> -> vector<128x128xf32>
    %19 = arith.addf %15, %18 : vector<128x128xf32>
    %c0_21 = arith.constant 0 : index
    %c0_22 = arith.constant 0 : index
    %20 = vector.load %arg10[%c0_21, %c0_22] : memref<128x128xf32, #tpu.memory_space<vmem>>, vector<128x128xf32>
    tpu.vector_store %arg10[%c0_21, %c0_22], %19 {strides = array<i32>} : memref<128x128xf32, #tpu.memory_space<vmem>>, vector<128x128xf32>,
    %21 = arith.addf %4, %14 : vector<128x256xbf16>
    %c2 = arith.constant 2 : index
    %c0_23 = arith.constant 0 : index
    %c0_24 = arith.constant 0 : index
    %22 = vector.load %arg2[%c2, %c0_23, %c0_24] : memref<3x128x256xbf16, #tpu.memory_space<vmem>>, vector<1x128x256xbf16>
    %23 = vector.shape_cast %22 : vector<1x128x256xbf16> to vector<128x256xbf16>
    %c0_25 = arith.constant 0 : index
    %c0_26 = arith.constant 0 : index
    %24 = vector.load %arg10[%c0_25, %c0_26] : memref<128x128xf32, #tpu.memory_space<vmem>>, vector<128x128xf32>
    %c2_27 = arith.constant 2 : index
    %c0_28 = arith.constant 0 : index
    %c0_29 = arith.constant 0 : index
    %25 = vector.load %arg4[%c2_27, %c0_28, %c0_29] : memref<3x256x128xbf16, #tpu.memory_space<vmem>>, vector<1x256x128xbf16>
    %26 = vector.shape_cast %25 : vector<1x256x128xbf16> to vector<256x128xbf16>
    %cst_30 = arith.constant dense<0.000000e+00> : vector<128x128xf32>
    %27 = tpu.matmul %23, %26, %cst_30 {dimension_numbers = #tpu.dot_dimension_numbers<[1], [0], [0], [1], [0, 0, 1, 1], [], []>} : vector<128x256xbf16>, vector<256x128xbf16>, vector<128x128xf32> -> vector<128x128xf32>
    %28 = arith.addf %24, %27 : vector<128x128xf32>
    %c0_31 = arith.constant 0 : index
    %c0_32 = arith.constant 0 : index
    %29 = vector.load %arg10[%c0_31, %c0_32] : memref<128x128xf32, #tpu.memory_space<vmem>>, vector<128x128xf32>
    tpu.vector_store %arg10[%c0_31, %c0_32], %28 {strides = array<i32>} : memref<128x128xf32, #tpu.memory_space<vmem>>, vector<128x128xf32>,
    %30 = arith.addf %21, %23 : vector<128x256xbf16>
    %c0_33 = arith.constant 0 : index
    %c0_34 = arith.constant 0 : index
    %31 = vector.load %arg11[%c0_33, %c0_34] : memref<128x32xf32, #tpu.memory_space<vmem>>, vector<128x32xf32>
    %c0_35 = arith.constant 0 : index
    %c0_36 = arith.constant 0 : index
    %32 = vector.load %arg3[%c0_35, %c0_36] : memref<256x32xbf16, #tpu.memory_space<vmem>>, vector<256x32xbf16>
    %cst_37 = arith.constant dense<0.000000e+00> : vector<128x32xf32>
    %33 = tpu.matmul %30, %32, %cst_37 {dimension_numbers = #tpu.dot_dimension_numbers<[1], [0], [0], [1], [0, 0, 1, 1], [], []>} : vector<128x256xbf16>, vector<256x32xbf16>, vector<128x32xf32> -> vector<128x32xf32>
    %34 = arith.addf %31, %33 : vector<128x32xf32>
    %c0_38 = arith.constant 0 : index
    %c0_39 = arith.constant 0 : index
    %35 = vector.load %arg11[%c0_38, %c0_39] : memref<128x32xf32, #tpu.memory_space<vmem>>, vector<128x32xf32>
    tpu.vector_store %arg11[%c0_38, %c0_39], %34 {strides = array<i32>} : memref<128x32xf32, #tpu.memory_space<vmem>>, vector<128x32xf32>,
    %c0_i32_40 = arith.constant 0 : i32
    %36 = arith.cmpi eq, %arg1, %c0_i32_40 : i32
    %37 = arith.extui %36 : i1 to i32
    %c0_i32_41 = arith.constant 0 : i32
    %38 = arith.cmpi ne, %37, %c0_i32_41 : i32
    scf.if %38 {
      %c0_42 = arith.constant 0 : index
      %c0_43 = arith.constant 0 : index
      %39 = vector.load %arg11[%c0_42, %c0_43] : memref<128x32xf32, #tpu.memory_space<vmem>>, vector<128x32xf32>
      %cst_44 = arith.constant dense<0.000000e+00> : vector<128xf32>
      %40 = vector.multi_reduction <add>, %39, %cst_44 [1] : vector<128x32xf32> to vector<128xf32>
      %41 = vector.shape_cast %40 : vector<128xf32> to vector<128x1xf32>
      %cst_45 = arith.constant 3.200000e+01 : f32
      %42 = vector.broadcast %cst_45 : f32 to vector<128x1xf32>
      %43 = arith.divf %41, %42 : vector<128x1xf32>
      %44 = vector.broadcast %43 : vector<128x1xf32> to vector<128x32xf32>
      %45 = arith.subf %39, %44 : vector<128x32xf32>
      %46 = arith.mulf %45, %45 : vector<128x32xf32>
      %cst_46 = arith.constant dense<0.000000e+00> : vector<128xf32>
      %47 = vector.multi_reduction <add>, %46, %cst_46 [1] : vector<128x32xf32> to vector<128xf32>
      %48 = vector.shape_cast %47 : vector<128xf32> to vector<128x1xf32>
      %cst_47 = arith.constant 3.200000e+01 : f32
      %49 = vector.broadcast %cst_47 : f32 to vector<128x1xf32>
      %50 = arith.divf %48, %49 : vector<128x1xf32>
      %cst_48 = arith.constant 9.99999997E-7 : f32
      %51 = vector.broadcast %cst_48 : f32 to vector<128x1xf32>
      %52 = arith.addf %50, %51 : vector<128x1xf32>
      %53 = math.rsqrt %52 : vector<128x1xf32>
      %54 = vector.broadcast %53 : vector<128x1xf32> to vector<128x32xf32>
      %55 = arith.mulf %45, %54 : vector<128x32xf32>
      %c0_49 = arith.constant 0 : index
      %c0_50 = arith.constant 0 : index
      %56 = vector.load %arg6[%c0_49, %c0_50] : memref<1x32xf32, #tpu.memory_space<vmem>>, vector<1x32xf32>
      %57 = vector.broadcast %56 : vector<1x32xf32> to vector<128x32xf32>
      %58 = arith.mulf %55, %57 : vector<128x32xf32>
      %c0_51 = arith.constant 0 : index
      %c0_52 = arith.constant 0 : index
      %59 = vector.load %arg7[%c0_51, %c0_52] : memref<1x32xf32, #tpu.memory_space<vmem>>, vector<1x32xf32>
      %60 = vector.broadcast %59 : vector<1x32xf32> to vector<128x32xf32>
      %61 = arith.addf %58, %60 : vector<128x32xf32>
      %62 = arith.truncf %61 : vector<128x32xf32> to vector<128x32xbf16>
      %c0_53 = arith.constant 0 : index
      %c0_54 = arith.constant 0 : index
      %63 = vector.load %arg5[%c0_53, %c0_54] : memref<32x128xbf16, #tpu.memory_space<vmem>>, vector<32x128xbf16>
      %cst_55 = arith.constant dense<0.000000e+00> : vector<128x128xf32>
      %64 = tpu.matmul %62, %63, %cst_55 {dimension_numbers = #tpu.dot_dimension_numbers<[1], [0], [0], [1], [0, 0, 1, 1], [], []>} : vector<128x32xbf16>, vector<32x128xbf16>, vector<128x128xf32> -> vector<128x128xf32>
      %c0_56 = arith.constant 0 : index
      %c0_57 = arith.constant 0 : index
      %65 = vector.load %arg10[%c0_56, %c0_57] : memref<128x128xf32, #tpu.memory_space<vmem>>, vector<128x128xf32>
      %66 = arith.addf %65, %64 : vector<128x128xf32>
      %cst_58 = arith.constant 5.000000e-01 : f32
      %67 = vector.broadcast %cst_58 : f32 to vector<128x128xf32>
      %68 = arith.mulf %66, %67 : vector<128x128xf32>
      %c0_59 = arith.constant 0 : index
      %c0_60 = arith.constant 0 : index
      %69 = vector.load %arg8[%c0_59, %c0_60] : memref<1x128xf32, #tpu.memory_space<vmem>>, vector<1x128xf32>
      %70 = vector.broadcast %69 : vector<1x128xf32> to vector<128x128xf32>
      %71 = arith.addf %68, %70 : vector<128x128xf32>
      %c0_61 = arith.constant 0 : index
      %c0_62 = arith.constant 0 : index
      %72 = vector.load %arg9[%c0_61, %c0_62] : memref<128x128xf32, #tpu.memory_space<vmem>>, vector<128x128xf32>
      tpu.vector_store %arg9[%c0_61, %c0_62], %71 {strides = array<i32>} : memref<128x128xf32, #tpu.memory_space<vmem>>, vector<128x128xf32>,
    } else {
    }
    return
  }
  func.func @transform_0(%arg0: i32, %arg1: i32) -> (i32, i32, i32) {
    %c0_i32 = arith.constant 0 : i32
    %c0_i32_0 = arith.constant 0 : i32
    return %c0_i32, %arg0, %arg1 : i32, i32, i32
  }
  func.func @transform_1(%arg0: i32, %arg1: i32) -> (i32, i32) {
    %c0_i32 = arith.constant 0 : i32
    %c0_i32_0 = arith.constant 0 : i32
    return %arg1, %c0_i32 : i32, i32
  }
  func.func @transform_2(%arg0: i32, %arg1: i32) -> (i32, i32, i32) {
    %c0_i32 = arith.constant 0 : i32
    %c0_i32_0 = arith.constant 0 : i32
    %c0_i32_1 = arith.constant 0 : i32
    return %c0_i32, %arg1, %c0_i32_0 : i32, i32, i32
  }
  func.func @transform_3(%arg0: i32, %arg1: i32) -> (i32, i32) {
    %c0_i32 = arith.constant 0 : i32
    %c0_i32_0 = arith.constant 0 : i32
    %c0_i32_1 = arith.constant 0 : i32
    return %c0_i32, %c0_i32_0 : i32, i32
  }
  func.func @transform_4(%arg0: i32, %arg1: i32) -> (i32, i32) {
    %c0_i32 = arith.constant 0 : i32
    %c0_i32_0 = arith.constant 0 : i32
    %c0_i32_1 = arith.constant 0 : i32
    return %c0_i32, %c0_i32_0 : i32, i32
  }
  func.func @transform_5(%arg0: i32, %arg1: i32) -> (i32, i32) {
    %c0_i32 = arith.constant 0 : i32
    %c0_i32_0 = arith.constant 0 : i32
    %c0_i32_1 = arith.constant 0 : i32
    return %c0_i32, %c0_i32_0 : i32, i32
  }
  func.func @transform_6(%arg0: i32, %arg1: i32) -> (i32, i32) {
    %c0_i32 = arith.constant 0 : i32
    %c0_i32_0 = arith.constant 0 : i32
    %c0_i32_1 = arith.constant 0 : i32
    return %c0_i32, %c0_i32_0 : i32, i32
  }
  func.func @transform_7(%arg0: i32, %arg1: i32) -> (i32, i32) {
    %c0_i32 = arith.constant 0 : i32
    %c0_i32_0 = arith.constant 0 : i32
    return %arg0, %c0_i32 : i32, i32
  }
}

</mosaic_0001>

<llo_original>
// kernel: tpu_custom_call.1
$region0: #{tpu_custom_call.1}
  #allocation0 [shape = 'u32[]', space=smem, size = 0x4, offset = 0x4, fixed_abs, tag = 'smem constant byte address 0x4 - core index']
  #allocation1 [shape = 'u32[144,128]{1,0:T(1,128)}', space=vmem, size = 0x12000, scoped, tag = 'internal scratch']
  #allocation2 [shape = 'f32[128,128]{1,0:T(8,128)}', space=vmem, size = 0x10000, scoped, tag = 'scratch operand']
  #allocation3 [shape = 'f32[128,32]{1,0:T(8,128)}', space=vmem, size = 0x10000, scoped, tag = 'scratch operand']
  #allocation10 [shape = 's32[]', space=sflag, size = 0x4, offset = 0, fixed_abs, tag = 'sflag constant byte address 0x0 - dummy sync flag']
  %s0 = inlined_call_operand.hbm [shape: bf16[3,256,256], index: 0, kind: input, shape index: {}]
  %s1 = inlined_call_operand.vmem [shape: bf16[256,32], index: 1, kind: input, shape index: {}]
  %s2 = inlined_call_operand.hbm [shape: bf16[3,256,128], index: 2, kind: input, shape index: {}]
  %s3 = inlined_call_operand.vmem [shape: bf16[32,128], index: 3, kind: input, shape index: {}]
  %s4 = inlined_call_operand.vmem [shape: f32[1,32], index: 4, kind: input, shape index: {}]
  %s5 = inlined_call_operand.vmem [shape: f32[1,32], index: 5, kind: input, shape index: {}]
  %s6 = inlined_call_operand.vmem [shape: f32[1,128], index: 6, kind: input, shape index: {}]
  %s7 = inlined_call_operand.hbm [shape: f32[256,128], index: 7, kind: output, shape index: {}]
  %s8 = sld [smem:[#allocation0]]
  $region77: #{tpu_custom_call.1} parent=0
    _
  %s10 = ssub.s32 1, %s8
  %s11 = scalar_select 0, %s10, %s8
  $region1: #{tpu_custom_call.1} parent=0
    #allocation4 [shape = 'u8[393216]{0}', space=vmem, size = 0x60000, scoped, tag = 'input window, operand 0']
    #allocation5 [shape = 's32[2]{0}', space=sflag, size = 0x8, scoped, tag = 'scoped memory for tpu_custom_call.1']
    #allocation6 [shape = 's32[2]{0}', space=sflag, size = 0x8, scoped, tag = 'scoped memory for tpu_custom_call.1']
    #allocation7 [shape = 'u8[196608]{0}', space=vmem, size = 0x30000, scoped, tag = 'input window, operand 2, single buffered']
    #allocation8 [shape = 's32[1]{0}', space=sflag, size = 0x4, scoped, tag = 'scoped memory for tpu_custom_call.1']
    #allocation9 [shape = 'u8[131072]{0}', space=vmem, size = 0x20000, scoped, tag = 'output window, operand 0']
    %12 = vsyncpa [#allocation5], 0
    %s13 = scalar_lea.sflag [#allocation5], 1
    %14 = vsyncpa %s13, 0
    %15 = vsyncpa [#allocation8], 0
    %16 = vsyncpa [#allocation6], 0
    %s17 = scalar_lea.sflag [#allocation6], 1
    %18 = vsyncpa %s17, 0
    loop: start=0, step=1, limit=4
    $region2: #{tpu_custom_call.1} parent=1 // loop_pre_header
      _
    $region3: #{tpu_custom_call.1} parent=1 // loop_header
      %s20 = sphi 0, %s24
      %p21 = scmp.ge.s32.totalorder %s20, 4
      %s27 = sphi 0, %s39
      %s28 = sphi 0, %s35
      %s29 = sphi 0, %s27
      %s30 = sphi 0, %s28
      %s31 = sphi 0, %s29
      %s32 = sphi 0, %s30
      %s44 = sphi 0, %s46
      %s47 = sphi 0, %s44
      %s48 = sphi 0, %s47
      %s64 = sphi 0, %s48
      %s70 = sphi 0, %s72
      %s73 = sphi 0, %s70
      %s74 = sphi 0, %s73
      %s90 = sphi 0, %s74
      %s96 = sphi 0, %s98
      %s99 = sphi 0, %s96
      %s100 = sphi 0, %s99
      %s116 = sphi 0, %s100
      %s120 = sphi 0, %s120
      %s122 = sphi 0, %s120
      %s123 = sphi 0, %s122
      %s137 = sphi 0, %s123
      %s141 = sphi 0, %s141
      %s143 = sphi 0, %s141
      %s144 = sphi 0, %s143
      %s158 = sphi 0, %s144
      %s162 = sphi 0, %s162
      %s164 = sphi 0, %s162
      %s165 = sphi 0, %s164
      %s179 = sphi 0, %s165
      %s183 = sphi 0, %s183
      %s185 = sphi 0, %s183
      %s186 = sphi 0, %s185
      %s200 = sphi 0, %s186
      %s206 = sphi 0, %s208
      %s209 = sphi 0, %s206
      %s210 = sphi 0, %s209
      %s226 = sphi 0, %s210
    $region4: #{tpu_custom_call.1} parent=1 // loop_header_branch
      %23 = sbr.rel (%p21) target = $region8
    $region5: #{tpu_custom_call.1} parent=1 // loop_body
      %s25 = ssub.s32 %s20, 1
      %s26 = ssub.s32 %s20, 2
      %s33 = sadd.s32 1, %s28
      %p34 = scmp.ge.s32.totalorder %s33, 1
      %s35 = scalar_select %p34, 0, %s33
      %s36 = sadd.s32 1, %s27
      %s37 = scalar_select %p34, %s36, %s27
      %p38 = scmp.ge.s32.totalorder %s37, 2
      %s39 = scalar_select %p38, 0, %s37
      %s40 = ssub.s32 %s27, %s39
      %s41 = ssub.s32 %s28, %s35
      %s42 = sor.u32 %s40, %s41
      %p43 = scmp.eq.s32.totalorder %s42, 0
      %s45 = sadd.s32 %s44, 1
      %s46 = scalar_select %p43, %s44, %s45
      %p49 = pneg %p43
      %p50 = scmp.eq.s32.totalorder %s20, 1
      %p51 = por %p49, %p50
      %p52 = scmp.ne.s32.totalorder %s44, %s47
      %p53 = scmp.eq.s32.totalorder %s20, 0
      %p54 = por %p52, %p53
      %p55 = scmp.ne.s32.totalorder %s44, %s47
      %p56 = scmp.eq.s32.totalorder %s25, 1
      %p57 = por %p55, %p56
      %p58 = scmp.ne.s32.totalorder %s47, %s48
      %p59 = scmp.eq.s32.totalorder %s25, 0
      %p60 = por %p58, %p59
      %p61 = scmp.ne.s32.totalorder %s47, %s48
      %p62 = scmp.eq.s32.totalorder %s26, 1
      %p63 = por %p61, %p62
      %p65 = scmp.ne.s32.totalorder %s48, %s64
      %p66 = scmp.eq.s32.totalorder %s26, 0
      %p67 = por %p65, %p66
      %s68 = ssub.s32 %s28, %s35
      %p69 = scmp.eq.s32.totalorder %s68, 0
      %s71 = sadd.s32 %s70, 1
      %s72 = scalar_select %p69, %s70, %s71
      %p75 = pneg %p69
      %p76 = scmp.eq.s32.totalorder %s20, 1
      %p77 = por %p75, %p76
      %p78 = scmp.ne.s32.totalorder %s70, %s73
      %p79 = scmp.eq.s32.totalorder %s20, 0
      %p80 = por %p78, %p79
      %p81 = scmp.ne.s32.totalorder %s70, %s73
      %p82 = scmp.eq.s32.totalorder %s25, 1
      %p83 = por %p81, %p82
      %p84 = scmp.ne.s32.totalorder %s73, %s74
      %p85 = scmp.eq.s32.totalorder %s25, 0
      %p86 = por %p84, %p85
      %p87 = scmp.ne.s32.totalorder %s73, %s74
      %p88 = scmp.eq.s32.totalorder %s26, 1
      %p89 = por %p87, %p88
      %p91 = scmp.ne.s32.totalorder %s74, %s90
      %p92 = scmp.eq.s32.totalorder %s26, 0
      %p93 = por %p91, %p92
      %s94 = ssub.s32 %s28, %s35
      %p95 = scmp.eq.s32.totalorder %s94, 0
      %s97 = sadd.s32 %s96, 1
      %s98 = scalar_select %p95, %s96, %s97
      %p101 = pneg %p95
      %p102 = scmp.eq.s32.totalorder %s20, 1
      %p103 = por %p101, %p102
      %p104 = scmp.ne.s32.totalorder %s96, %s99
      %p105 = scmp.eq.s32.totalorder %s20, 0
      %p106 = por %p104, %p105
      %p107 = scmp.ne.s32.totalorder %s96, %s99
      %p108 = scmp.eq.s32.totalorder %s25, 1
      %p109 = por %p107, %p108
      %p110 = scmp.ne.s32.totalorder %s99, %s100
      %p111 = scmp.eq.s32.totalorder %s25, 0
      %p112 = por %p110, %p111
      %p113 = scmp.ne.s32.totalorder %s99, %s100
      %p114 = scmp.eq.s32.totalorder %s26, 1
      %p115 = por %p113, %p114
      %p117 = scmp.ne.s32.totalorder %s100, %s116
      %p118 = scmp.eq.s32.totalorder %s26, 0
      %p119 = por %p117, %p118
      %s121 = sadd.s32 %s120, 1
      %p124 = scmp.eq.s32.totalorder %s20, 1
      %p125 = scmp.ne.s32.totalorder %s120, %s122
      %p126 = scmp.eq.s32.totalorder %s20, 0
      %p127 = por %p125, %p126
      %p128 = scmp.ne.s32.totalorder %s120, %s122
      %p129 = scmp.eq.s32.totalorder %s25, 1
      %p130 = por %p128, %p129
      %p131 = scmp.ne.s32.totalorder %s122, %s123
      %p132 = scmp.eq.s32.totalorder %s25, 0
      %p133 = por %p131, %p132
      %p134 = scmp.ne.s32.totalorder %s122, %s123
      %p135 = scmp.eq.s32.totalorder %s26, 1
      %p136 = por %p134, %p135
      %p138 = scmp.ne.s32.totalorder %s123, %s137
      %p139 = scmp.eq.s32.totalorder %s26, 0
      %p140 = por %p138, %p139
      %s142 = sadd.s32 %s141, 1
      %p145 = scmp.eq.s32.totalorder %s20, 1
      %p146 = scmp.ne.s32.totalorder %s141, %s143
      %p147 = scmp.eq.s32.totalorder %s20, 0
      %p148 = por %p146, %p147
      %p149 = scmp.ne.s32.totalorder %s141, %s143
      %p150 = scmp.eq.s32.totalorder %s25, 1
      %p151 = por %p149, %p150
      %p152 = scmp.ne.s32.totalorder %s143, %s144
      %p153 = scmp.eq.s32.totalorder %s25, 0
      %p154 = por %p152, %p153
      %p155 = scmp.ne.s32.totalorder %s143, %s144
      %p156 = scmp.eq.s32.totalorder %s26, 1
      %p157 = por %p155, %p156
      %p159 = scmp.ne.s32.totalorder %s144, %s158
      %p160 = scmp.eq.s32.totalorder %s26, 0
      %p161 = por %p159, %p160
      %s163 = sadd.s32 %s162, 1
      %p166 = scmp.eq.s32.totalorder %s20, 1
      %p167 = scmp.ne.s32.totalorder %s162, %s164
      %p168 = scmp.eq.s32.totalorder %s20, 0
      %p169 = por %p167, %p168
      %p170 = scmp.ne.s32.totalorder %s162, %s164
      %p171 = scmp.eq.s32.totalorder %s25, 1
      %p172 = por %p170, %p171
      %p173 = scmp.ne.s32.totalorder %s164, %s165
      %p174 = scmp.eq.s32.totalorder %s25, 0
      %p175 = por %p173, %p174
      %p176 = scmp.ne.s32.totalorder %s164, %s165
      %p177 = scmp.eq.s32.totalorder %s26, 1
      %p178 = por %p176, %p177
      %p180 = scmp.ne.s32.totalorder %s165, %s179
      %p181 = scmp.eq.s32.totalorder %s26, 0
      %p182 = por %p180, %p181
      %s184 = sadd.s32 %s183, 1
      %p187 = scmp.eq.s32.totalorder %s20, 1
      %p188 = scmp.ne.s32.totalorder %s183, %s185
      %p189 = scmp.eq.s32.totalorder %s20, 0
      %p190 = por %p188, %p189
      %p191 = scmp.ne.s32.totalorder %s183, %s185
      %p192 = scmp.eq.s32.totalorder %s25, 1
      %p193 = por %p191, %p192
      %p194 = scmp.ne.s32.totalorder %s185, %s186
      %p195 = scmp.eq.s32.totalorder %s25, 0
      %p196 = por %p194, %p195
      %p197 = scmp.ne.s32.totalorder %s185, %s186
      %p198 = scmp.eq.s32.totalorder %s26, 1
      %p199 = por %p197, %p198
      %p201 = scmp.ne.s32.totalorder %s186, %s200
      %p202 = scmp.eq.s32.totalorder %s26, 0
      %p203 = por %p201, %p202
      %s204 = ssub.s32 %s27, %s39
      %p205 = scmp.eq.s32.totalorder %s204, 0
      %s207 = sadd.s32 %s206, 1
      %s208 = scalar_select %p205, %s206, %s207
      %p211 = pneg %p205
      %p212 = scmp.eq.s32.totalorder %s20, 1
      %p213 = por %p211, %p212
      %p214 = scmp.ne.s32.totalorder %s206, %s209
      %p215 = scmp.eq.s32.totalorder %s20, 0
      %p216 = por %p214, %p215
      %p217 = scmp.ne.s32.totalorder %s206, %s209
      %p218 = scmp.eq.s32.totalorder %s25, 1
      %p219 = por %p217, %p218
      %p220 = scmp.ne.s32.totalorder %s209, %s210
      %p221 = scmp.eq.s32.totalorder %s25, 0
      %p222 = por %p220, %p221
      %p223 = scmp.ne.s32.totalorder %s209, %s210
      %p224 = scmp.eq.s32.totalorder %s26, 1
      %p225 = por %p223, %p224
      %p227 = scmp.ne.s32.totalorder %s210, %s226
      %p228 = scmp.eq.s32.totalorder %s26, 0
      %p229 = por %p227, %p228
      %p230 = scmp.le.s32.totalorder 1, %s20
      %p231 = scmp.lt.s32.totalorder %s20, 3
      %p232 = pnand %p230, %p231
      %p233 = pneg %p232
      // Predicated region
      $region9: #{tpu_custom_call.1} parent=5 // pred_check
        _
      $region10: #{tpu_custom_call.1} parent=5 // pred_check_branch
        %235 = sbr.rel (%p232) target = $region12
      $region11: #{tpu_custom_call.1} parent=5 // pred_region
        %s236 = ssub.s32 %s20, 1
        // Predicated region
        $region13: #{tpu_custom_call.1} parent=11 // pred_check
          %p237 = pneg %p86
        $region14: #{tpu_custom_call.1} parent=11 // pred_check_branch
          %239 = sbr.rel (%p237) target = $region16
        $region15: #{tpu_custom_call.1} parent=11 // pred_region
          %s240 = smul.u32 32, %s30
          %p241 = scmp.lt.s32.totalorder %s240, 31
          %s242 = scalar_select %p241, %s240, 31
          %s243 = smul.addr %s242, 4
          %s244 = scalar_lea.vmem %s1, %s243
          %s245 = smul.u32 32, %s30
        $region16: #{tpu_custom_call.1} parent=11 // pred_fallthru
          _
        // Predicated region
        $region17: #{tpu_custom_call.1} parent=11 // pred_check
          %p246 = pneg %p112
        $region18: #{tpu_custom_call.1} parent=11 // pred_check_branch
          %248 = sbr.rel (%p246) target = $region20
        $region19: #{tpu_custom_call.1} parent=11 // pred_region
          %s249 = smul.u32 32, %s30
          %s251 = ssub.s32 6144, 6144
          %252 = vsyncadd [#allocation8], %s251
          %s253 = smul.addr %s249, 64
          %s254 = scalar_lea.hbm %s2, %s253
          %s255 = sshll.u32 [#allocation7], 4
          %s256 = int_to_ptr.vmem [resolvable:$true] %s255
          %261 = dma.hbm_to_vmem [thread:$0]  %s254, 6144, %s256, [#allocation8], 64, 64, 4
        $region20: #{tpu_custom_call.1} parent=11 // pred_fallthru
          _
        // Predicated region
        $region21: #{tpu_custom_call.1} parent=11 // pred_check
          %p262 = pneg %p133
        $region22: #{tpu_custom_call.1} parent=11 // pred_check_branch
          %264 = sbr.rel (%p262) target = $region24
        $region23: #{tpu_custom_call.1} parent=11 // pred_region
          _
        $region24: #{tpu_custom_call.1} parent=11 // pred_fallthru
          _
        // Predicated region
        $region25: #{tpu_custom_call.1} parent=11 // pred_check
          %p265 = pneg %p154
        $region26: #{tpu_custom_call.1} parent=11 // pred_check_branch
          %267 = sbr.rel (%p265) target = $region28
        $region27: #{tpu_custom_call.1} parent=11 // pred_region
          _
        $region28: #{tpu_custom_call.1} parent=11 // pred_fallthru
          _
        // Predicated region
        $region29: #{tpu_custom_call.1} parent=11 // pred_check
          %p268 = pneg %p175
        $region30: #{tpu_custom_call.1} parent=11 // pred_check_branch
          %270 = sbr.rel (%p268) target = $region32
        $region31: #{tpu_custom_call.1} parent=11 // pred_region
          _
        $region32: #{tpu_custom_call.1} parent=11 // pred_fallthru
          _
        // Predicated region
        $region33: #{tpu_custom_call.1} parent=11 // pred_check
          %p271 = pneg %p196
        $region34: #{tpu_custom_call.1} parent=11 // pred_check_branch
          %273 = sbr.rel (%p271) target = $region36
        $region35: #{tpu_custom_call.1} parent=11 // pred_region
          _
        $region36: #{tpu_custom_call.1} parent=11 // pred_fallthru
          _
      $region12: #{tpu_custom_call.1} parent=5 // pred_fallthru
        _
      %p274 = scmp.lt.s32.totalorder %s20, 2
      // Predicated region
      $region37: #{tpu_custom_call.1} parent=5 // pred_check
        %p275 = pneg %p274
      $region38: #{tpu_custom_call.1} parent=5 // pred_check_branch
        %277 = sbr.rel (%p275) target = $region40
      $region39: #{tpu_custom_call.1} parent=5 // pred_region
        // Predicated region
        $region41: #{tpu_custom_call.1} parent=39 // pred_check
          %p278 = pneg %p54
        $region42: #{tpu_custom_call.1} parent=39 // pred_check_branch
          %280 = sbr.rel (%p278) target = $region44
        $region43: #{tpu_custom_call.1} parent=39 // pred_region
          #allocation11 [shape = 'u32[6]{0}', space=smem, size = 0x18, scoped, tag = 'DMA stride descriptor']
          %s281 = sand.u32 %s44, 1
          %s282 = scalar_lea.sflag [#allocation5], %s281
          %s283 = sand.u32 %s44, 1
          %s284 = smul.addr %s283, 384
          %s285 = scalar_lea.vmem [#allocation4], %s284
          %s286 = smul.u32 16, %s27
          %s287 = smul.u32 2, %s28
          %s289 = ssub.s32 6144, 6144
          %290 = vsyncadd %s282, %s289
          %s291 = smul.addr %s286, 2
          %s292 = sadd.s32 %s287, %s291
          %s293 = smul.addr %s292, 64
          %s294 = scalar_lea.hbm %s0, %s293
          %s296 = sshll.u32 1, 14
          %s297 = sxor.u32 4294967295, %s296
          %s299 = sld [smem:[#allocation0]]
          %s300 = sadd.s32 2, %s299
          %s302 = sshll.u32 7, 26
          %s303 = sxor.u32 4294967295, %s302
          %s304 = sand.u32 0, %s303
          %s305 = sshll.u32 %s300, 26
          %s306 = sor.u32 %s304, %s305
          %s307 = sshll.u32 %s285, 4
          %s308 = int_to_ptr.vmem [resolvable:$true] %s307
          %314 = sst [smem:[#allocation11]] 4096
          %s315 = scalar_lea.smem [#allocation11], 1
          %316 = sst [smem:[%s315]] 2048
          %s317 = scalar_lea.smem [#allocation11], 2
          %318 = sst [smem:[%s317]] 16
          %s319 = scalar_lea.smem [#allocation11], 3
          %320 = sst [smem:[%s319]] 128
          %s321 = scalar_lea.smem [#allocation11], 4
          %322 = sst [smem:[%s321]] 128
          %s323 = scalar_lea.smem [#allocation11], 5
          %324 = sst [smem:[%s323]] 8
          %326 = dma.general %s294, 6144, %s308, %s282, 131072, [#allocation11], %s306, 0
        $region44: #{tpu_custom_call.1} parent=39 // pred_fallthru
          _
      $region40: #{tpu_custom_call.1} parent=5 // pred_fallthru
        _
      %p327 = scmp.le.s32.totalorder 1, %s20
      %p328 = scmp.lt.s32.totalorder %s20, 3
      %p329 = pnand %p327, %p328
      %p330 = pneg %p329
      // Predicated region
      $region45: #{tpu_custom_call.1} parent=5 // pred_check
        _
      $region46: #{tpu_custom_call.1} parent=5 // pred_check_branch
        %332 = sbr.rel (%p329) target = $region48
      $region47: #{tpu_custom_call.1} parent=5 // pred_region
        %s333 = ssub.s32 %s20, 1
        %s334 = sand.u32 %s47, 1
        %s335 = scalar_lea.sflag [#allocation5], %s334
        %s336 = sand.u32 %s47, 1
        %s337 = smul.addr %s336, 384
        %s338 = scalar_lea.vmem [#allocation4], %s337
        // Predicated region
        $region49: #{tpu_custom_call.1} parent=47 // pred_check
          %p339 = pneg %p60
        $region50: #{tpu_custom_call.1} parent=47 // pred_check_branch
          %341 = sbr.rel (%p339) target = $region52
        $region51: #{tpu_custom_call.1} parent=47 // pred_region
          %342 = dma.done %s335, 6144
        $region52: #{tpu_custom_call.1} parent=47 // pred_fallthru
          _
        // Predicated region
        $region53: #{tpu_custom_call.1} parent=47 // pred_check
          %p343 = pneg %p112
        $region54: #{tpu_custom_call.1} parent=47 // pred_check_branch
          %345 = sbr.rel (%p343) target = $region56
        $region55: #{tpu_custom_call.1} parent=47 // pred_region
          %346 = dma.done [#allocation8], 6144
        $region56: #{tpu_custom_call.1} parent=47 // pred_fallthru
          _
        %s347 = sand.u32 %s47, 1
        %s348 = scalar_lea.sflag [#allocation5], %s347
        %s349 = sand.u32 %s47, 1
        %s350 = smul.addr %s349, 384
        %s351 = scalar_lea.vmem [#allocation4], %s350
        %p352 = pneg %p60
        %p353 = pneg %p57
        %s354 = smul.u32 32, %s30
        %p355 = scmp.lt.s32.totalorder %s354, 31
        %s356 = scalar_select %p355, %s354, 31
        %s357 = smul.addr %s356, 4
        %s358 = scalar_lea.vmem %s1, %s357
        %p359 = pneg %p86
        %p360 = pneg %p83
        %p361 = pneg %p112
        %p362 = pneg %p109
        %p363 = pneg %p133
        %p364 = pneg %p130
        %p365 = pneg %p154
        %p366 = pneg %p151
        %p367 = pneg %p175
        %p368 = pneg %p172
        %p369 = pneg %p196
        %p370 = pneg %p193
        %p371 = pneg %p222
        %p372 = pneg %p219
        %s373 = sand.u32 %s209, 1
        %s374 = scalar_lea.sflag [#allocation6], %s373
        %s375 = sand.u32 %s209, 1
        %s376 = smul.addr %s375, 128
        %s377 = scalar_lea.vmem [#allocation9], %s376
        %s378 = smul.u32 16, %s29
        %s379 = smul.u32 2, %s30
        %s380 = smul.u32 32, %s30
        %p381 = scmp.lt.s32.totalorder %s380, 31
        %s382 = scalar_select %p381, %s380, 31
        %s383 = smul.addr %s382, 4
        %s384 = scalar_lea.vmem %s1, %s383
        %s385 = smul.u32 32, %s30
        %s386 = smul.u32 32, %s30
        %s387 = smul.u32 16, %s29
        %p389 = scmp.eq.s32.totalorder %s30, 0
        // Predicated region
        $region57: #{tpu_custom_call.1} parent=47 // pred_check
          %p390 = pneg %p389
        $region58: #{tpu_custom_call.1} parent=47 // pred_check_branch
          %392 = sbr.rel (%p390) target = $region60
        $region59: #{tpu_custom_call.1} parent=47 // pred_region
          %393 = vst [vmem:[#allocation2] sm:$0xff] 0.0
          %394 = vst [vmem:[#allocation2 + $0x8] sm:$0xff] 0.0
          %395 = vst [vmem:[#allocation2 + $0x10] sm:$0xff] 0.0
          %396 = vst [vmem:[#allocation2 + $0x18] sm:$0xff] 0.0
          %397 = vst [vmem:[#allocation2 + $0x20] sm:$0xff] 0.0
          %398 = vst [vmem:[#allocation2 + $0x28] sm:$0xff] 0.0
          %399 = vst [vmem:[#allocation2 + $0x30] sm:$0xff] 0.0
          %400 = vst [vmem:[#allocation2 + $0x38] sm:$0xff] 0.0
          %401 = vst [vmem:[#allocation2 + $0x40] sm:$0xff] 0.0
          %402 = vst [vmem:[#allocation2 + $0x48] sm:$0xff] 0.0
          %403 = vst [vmem:[#allocation2 + $0x50] sm:$0xff] 0.0
          %404 = vst [vmem:[#allocation2 + $0x58] sm:$0xff] 0.0
          %405 = vst [vmem:[#allocation2 + $0x60] sm:$0xff] 0.0
          %406 = vst [vmem:[#allocation2 + $0x68] sm:$0xff] 0.0
          %407 = vst [vmem:[#allocation2 + $0x70] sm:$0xff] 0.0
          %408 = vst [vmem:[#allocation2 + $0x78] sm:$0xff] 0.0
          %vm409 = vcmask 261120
          %410 = vst.msk [vmem:[#allocation3] sm:$0xff] %vm409, 0.0
          %411 = vst.msk [vmem:[#allocation3 + $0x8] sm:$0xff] %vm409, 0.0
          %412 = vst.msk [vmem:[#allocation3 + $0x10] sm:$0xff] %vm409, 0.0
          %413 = vst.msk [vmem:[#allocation3 + $0x18] sm:$0xff] %vm409, 0.0
          %414 = vst.msk [vmem:[#allocation3 + $0x20] sm:$0xff] %vm409, 0.0
          %415 = vst.msk [vmem:[#allocation3 + $0x28] sm:$0xff] %vm409, 0.0
          %416 = vst.msk [vmem:[#allocation3 + $0x30] sm:$0xff] %vm409, 0.0
          %417 = vst.msk [vmem:[#allocation3 + $0x38] sm:$0xff] %vm409, 0.0
          %418 = vst.msk [vmem:[#allocation3 + $0x40] sm:$0xff] %vm409, 0.0
          %419 = vst.msk [vmem:[#allocation3 + $0x48] sm:$0xff] %vm409, 0.0
          %420 = vst.msk [vmem:[#allocation3 + $0x50] sm:$0xff] %vm409, 0.0
          %421 = vst.msk [vmem:[#allocation3 + $0x58] sm:$0xff] %vm409, 0.0
          %422 = vst.msk [vmem:[#allocation3 + $0x60] sm:$0xff] %vm409, 0.0
          %423 = vst.msk [vmem:[#allocation3 + $0x68] sm:$0xff] %vm409, 0.0
          %424 = vst.msk [vmem:[#allocation3 + $0x70] sm:$0xff] %vm409, 0.0
          %425 = vst.msk [vmem:[#allocation3 + $0x78] sm:$0xff] %vm409, 0.0
        $region60: #{tpu_custom_call.1} parent=47 // pred_fallthru
          _
        %v426 = vld [vmem:[%s338] sm:$0xff]
        %v427 = vld [vmem:[%s338 + $0x8] sm:$0xff]
        %v428 = vld [vmem:[%s338 + $0x10] sm:$0xff]
        %v429 = vld [vmem:[%s338 + $0x18] sm:$0xff]
        %v430 = vld [vmem:[%s338 + $0x20] sm:$0xff]
        %v431 = vld [vmem:[%s338 + $0x28] sm:$0xff]
        %v432 = vld [vmem:[%s338 + $0x30] sm:$0xff]
        %v433 = vld [vmem:[%s338 + $0x38] sm:$0xff]
        %v434 = vld [vmem:[%s338 + $0x40] sm:$0xff]
        %v435 = vld [vmem:[%s338 + $0x48] sm:$0xff]
        %v436 = vld [vmem:[%s338 + $0x50] sm:$0xff]
        %v437 = vld [vmem:[%s338 + $0x58] sm:$0xff]
        %v438 = vld [vmem:[%s338 + $0x60] sm:$0xff]
        %v439 = vld [vmem:[%s338 + $0x68] sm:$0xff]
        %v440 = vld [vmem:[%s338 + $0x70] sm:$0xff]
        %v441 = vld [vmem:[%s338 + $0x78] sm:$0xff]
        %v442 = vld [vmem:[#allocation2] sm:$0xff]
        %v443 = vld [vmem:[#allocation2 + $0x8] sm:$0xff]
        %v444 = vld [vmem:[#allocation2 + $0x10] sm:$0xff]
        %v445 = vld [vmem:[#allocation2 + $0x18] sm:$0xff]
        %v446 = vld [vmem:[#allocation2 + $0x20] sm:$0xff]
        %v447 = vld [vmem:[#allocation2 + $0x28] sm:$0xff]
        %v448 = vld [vmem:[#allocation2 + $0x30] sm:$0xff]
        %v449 = vld [vmem:[#allocation2 + $0x38] sm:$0xff]
        %v450 = vld [vmem:[#allocation2 + $0x40] sm:$0xff]
        %v451 = vld [vmem:[#allocation2 + $0x48] sm:$0xff]
        %v452 = vld [vmem:[#allocation2 + $0x50] sm:$0xff]
        %v453 = vld [vmem:[#allocation2 + $0x58] sm:$0xff]
        %v454 = vld [vmem:[#allocation2 + $0x60] sm:$0xff]
        %v455 = vld [vmem:[#allocation2 + $0x68] sm:$0xff]
        %v456 = vld [vmem:[#allocation2 + $0x70] sm:$0xff]
        %v457 = vld [vmem:[#allocation2 + $0x78] sm:$0xff]
        %v458 = vld [vmem:[#allocation7] sm:$0xf]
        %v459 = vld [vmem:[#allocation7 + $0x4] sm:$0xf]
        %v460 = vld [vmem:[#allocation7 + $0x8] sm:$0xf]
        %v461 = vld [vmem:[#allocation7 + $0xc] sm:$0xf]
        %v462 = vld [vmem:[#allocation7 + $0x10] sm:$0xf]
        %v463 = vld [vmem:[#allocation7 + $0x14] sm:$0xf]
        %v464 = vld [vmem:[#allocation7 + $0x18] sm:$0xf]
        %v465 = vld [vmem:[#allocation7 + $0x1c] sm:$0xf]
        %v466 = vld [vmem:[#allocation7 + $0x20] sm:$0xf]
        %v467 = vld [vmem:[#allocation7 + $0x24] sm:$0xf]
        %v468 = vld [vmem:[#allocation7 + $0x28] sm:$0xf]
        %v469 = vld [vmem:[#allocation7 + $0x2c] sm:$0xf]
        %v470 = vld [vmem:[#allocation7 + $0x30] sm:$0xf]
        %v471 = vld [vmem:[#allocation7 + $0x34] sm:$0xf]
        %v472 = vld [vmem:[#allocation7 + $0x38] sm:$0xf]
        %v473 = vld [vmem:[#allocation7 + $0x3c] sm:$0xf]
        %v474 = vld [vmem:[#allocation7 + $0x40] sm:$0xf]
        %v475 = vld [vmem:[#allocation7 + $0x44] sm:$0xf]
        %v476 = vld [vmem:[#allocation7 + $0x48] sm:$0xf]
        %v477 = vld [vmem:[#allocation7 + $0x4c] sm:$0xf]
        %v478 = vld [vmem:[#allocation7 + $0x50] sm:$0xf]
        %v479 = vld [vmem:[#allocation7 + $0x54] sm:$0xf]
        %v480 = vld [vmem:[#allocation7 + $0x58] sm:$0xf]
        %v481 = vld [vmem:[#allocation7 + $0x5c] sm:$0xf]
        %v482 = vld [vmem:[#allocation7 + $0x60] sm:$0xf]
        %v483 = vld [vmem:[#allocation7 + $0x64] sm:$0xf]
        %v484 = vld [vmem:[#allocation7 + $0x68] sm:$0xf]
        %v485 = vld [vmem:[#allocation7 + $0x6c] sm:$0xf]
        %v486 = vld [vmem:[#allocation7 + $0x70] sm:$0xf]
        %v487 = vld [vmem:[#allocation7 + $0x74] sm:$0xf]
        %v488 = vld [vmem:[#allocation7 + $0x78] sm:$0xf]
        %v489 = vld [vmem:[#allocation7 + $0x7c] sm:$0xf]
        %v506 = vunpack.c.l.b16 %v426
        %v507 = vunpack.c.h.b16 %v426
        %v508 = vunpack.c.l.b16 %v427
        %v509 = vunpack.c.h.b16 %v427
        %v510 = vunpack.c.l.b16 %v428
        %v511 = vunpack.c.h.b16 %v428
        %v512 = vunpack.c.l.b16 %v429
        %v513 = vunpack.c.h.b16 %v429
        %v514 = vunpack.c.l.b16 %v430
        %v515 = vunpack.c.h.b16 %v430
        %v516 = vunpack.c.l.b16 %v431
        %v517 = vunpack.c.h.b16 %v431
        %v518 = vunpack.c.l.b16 %v432
        %v519 = vunpack.c.h.b16 %v432
        %v520 = vunpack.c.l.b16 %v433
        %v521 = vunpack.c.h.b16 %v433
        %v522 = vunpack.c.l.b16 %v434
        %v523 = vunpack.c.h.b16 %v434
        %v524 = vunpack.c.l.b16 %v435
        %v525 = vunpack.c.h.b16 %v435
        %v526 = vunpack.c.l.b16 %v436
        %v527 = vunpack.c.h.b16 %v436
        %v528 = vunpack.c.l.b16 %v437
        %v529 = vunpack.c.h.b16 %v437
        %v530 = vunpack.c.l.b16 %v438
        %v531 = vunpack.c.h.b16 %v438
        %v532 = vunpack.c.l.b16 %v439
        %v533 = vunpack.c.h.b16 %v439
        %v534 = vunpack.c.l.b16 %v440
        %v535 = vunpack.c.h.b16 %v440
        %v536 = vunpack.c.l.b16 %v441
        %v537 = vunpack.c.h.b16 %v441
        %v538 = vpack.c.b16 %v508, %v506
        %v539 = vpack.c.b16 %v509, %v507
        %v540 = vpack.c.b16 %v512, %v510
        %v541 = vpack.c.b16 %v513, %v511
        %v542 = vpack.c.b16 %v516, %v514
        %v543 = vpack.c.b16 %v517, %v515
        %v544 = vpack.c.b16 %v520, %v518
        %v545 = vpack.c.b16 %v521, %v519
        %v546 = vpack.c.b16 %v524, %v522
        %v547 = vpack.c.b16 %v525, %v523
        %v548 = vpack.c.b16 %v528, %v526
        %v549 = vpack.c.b16 %v529, %v527
        %v550 = vpack.c.b16 %v532, %v530
        %v551 = vpack.c.b16 %v533, %v531
        %v552 = vpack.c.b16 %v536, %v534
        %v553 = vpack.c.b16 %v537, %v535
        %v602 = vunpack.c.l.b16 %v458
        %v603 = vunpack.c.l.b16 %v459
        %v604 = vunpack.c.l.b16 %v460
        %v605 = vunpack.c.l.b16 %v461
        %v606 = vunpack.c.l.b16 %v462
        %v607 = vunpack.c.l.b16 %v463
        %v608 = vunpack.c.l.b16 %v464
        %v609 = vunpack.c.l.b16 %v465
        %v610 = vunpack.c.l.b16 %v466
        %v611 = vunpack.c.l.b16 %v467
        %v612 = vunpack.c.l.b16 %v468
        %v613 = vunpack.c.l.b16 %v469
        %v614 = vunpack.c.l.b16 %v470
        %v615 = vunpack.c.l.b16 %v471
        %v616 = vunpack.c.l.b16 %v472
        %v617 = vunpack.c.l.b16 %v473
        %v618 = vunpack.c.l.b16 %v474
        %v619 = vunpack.c.l.b16 %v475
        %v620 = vunpack.c.l.b16 %v476
        %v621 = vunpack.c.l.b16 %v477
        %v622 = vunpack.c.l.b16 %v478
        %v623 = vunpack.c.l.b16 %v479
        %v624 = vunpack.c.l.b16 %v480
        %v625 = vunpack.c.l.b16 %v481
        %v626 = vunpack.c.l.b16 %v482
        %v627 = vunpack.c.l.b16 %v483
        %v628 = vunpack.c.l.b16 %v484
        %v629 = vunpack.c.l.b16 %v485
        %v630 = vunpack.c.l.b16 %v486
        %v631 = vunpack.c.l.b16 %v487
        %v632 = vunpack.c.l.b16 %v488
        %v633 = vunpack.c.l.b16 %v489
        %v634 = vpack.c.b16 %v603, %v602
        %v635 = vpack.c.b16 %v605, %v604
        %v636 = vpack.c.b16 %v607, %v606
        %v637 = vpack.c.b16 %v609, %v608
        %v638 = vpack.c.b16 %v611, %v610
        %v639 = vpack.c.b16 %v613, %v612
        %v640 = vpack.c.b16 %v615, %v614
        %v641 = vpack.c.b16 %v617, %v616
        %v642 = vpack.c.b16 %v619, %v618
        %v643 = vpack.c.b16 %v621, %v620
        %v644 = vpack.c.b16 %v623, %v622
        %v645 = vpack.c.b16 %v625, %v624
        %v646 = vpack.c.b16 %v627, %v626
        %v647 = vpack.c.b16 %v629, %v628
        %v648 = vpack.c.b16 %v631, %v630
        %v649 = vpack.c.b16 %v633, %v632
        %666 = vmatprep.subr.bf16.mxu0 0
        %667 = vmatpush1.bf16.msra.mxu0 %v641
        %668 = vmatprep.subr.bf16.mxu0 0
        %669 = vmatpush1.bf16.msra.mxu0 %v640
        %670 = vmatprep.subr.bf16.mxu0 0
        %671 = vmatpush1.bf16.msra.mxu0 %v639
        %672 = vmatprep.subr.bf16.mxu0 0
        %673 = vmatpush1.bf16.msra.mxu0 %v638
        %674 = vmatprep.subr.bf16.mxu0 0
        %675 = vmatpush1.bf16.msra.mxu0 %v637
        %676 = vmatprep.subr.bf16.mxu0 0
        %677 = vmatpush1.bf16.msra.mxu0 %v636
        %678 = vmatprep.subr.bf16.mxu0 0
        %679 = vmatpush1.bf16.msra.mxu0 %v635
        %680 = vmatprep.subr.bf16.mxu0 0
        %681 = vmatpush1.bf16.msra.mxu0 %v634
        %682 = vmatprep.subr.bf16.mxu0 0
        %683 = vmatpush2.bf16.msra.mxu0 %v649
        %684 = vmatprep.subr.bf16.mxu0 0
        %685 = vmatpush2.bf16.msra.mxu0 %v648
        %686 = vmatprep.subr.bf16.mxu0 0
        %687 = vmatpush2.bf16.msra.mxu0 %v647
        %688 = vmatprep.subr.bf16.mxu0 0
        %689 = vmatpush2.bf16.msra.mxu0 %v646
        %690 = vmatprep.subr.bf16.mxu0 0
        %691 = vmatpush2.bf16.msra.mxu0 %v645
        %692 = vmatprep.subr.bf16.mxu0 0
        %693 = vmatpush2.bf16.msra.mxu0 %v644
        %694 = vmatprep.subr.bf16.mxu0 0
        %695 = vmatpush2.bf16.msra.mxu0 %v643
        %696 = vmatprep.subr.bf16.mxu0 0
        %697 = vmatpush2.bf16.msra.mxu0 %v642
        %698 = vmatprep.mubr.bf16.mxu0 %v539
        %699 = vmatmul.mubr.bf16.gmra.mxu0 %v538
        %v700 = vpop.f32.mrf.mxu0
        %v701 = vadd.f32 0.0, %v700
        %v702 = vpop.f32.mrf.mxu0
        %v703 = vpop.f32.mrf.mxu0
        %v704 = vadd.f32 0.0, %v703
        %v705 = vpop.f32.mrf.mxu0
        %706 = vmatprep.mubr.bf16.mxu0 %v541
        %707 = vmatmul.mubr.bf16.gmra.mxu0 %v540
        %v708 = vpop.f32.mrf.mxu0
        %v709 = vadd.f32 0.0, %v708
        %v710 = vpop.f32.mrf.mxu0
        %v711 = vpop.f32.mrf.mxu0
        %v712 = vadd.f32 0.0, %v711
        %v713 = vpop.f32.mrf.mxu0
        %714 = vmatprep.mubr.bf16.mxu0 %v543
        %715 = vmatmul.mubr.bf16.gmra.mxu0 %v542
        %v716 = vpop.f32.mrf.mxu0
        %v717 = vadd.f32 0.0, %v716
        %v718 = vpop.f32.mrf.mxu0
        %v719 = vpop.f32.mrf.mxu0
        %v720 = vadd.f32 0.0, %v719
        %v721 = vpop.f32.mrf.mxu0
        %722 = vmatprep.mubr.bf16.mxu0 %v545
        %723 = vmatmul.mubr.bf16.gmra.mxu0 %v544
        %v724 = vpop.f32.mrf.mxu0
        %v725 = vadd.f32 0.0, %v724
        %v726 = vpop.f32.mrf.mxu0
        %v727 = vpop.f32.mrf.mxu0
        %v728 = vadd.f32 0.0, %v727
        %v729 = vpop.f32.mrf.mxu0
        %730 = vmatprep.mubr.bf16.mxu0 %v547
        %731 = vmatmul.mubr.bf16.gmra.mxu0 %v546
        %v732 = vpop.f32.mrf.mxu0
        %v733 = vadd.f32 0.0, %v732
        %v734 = vpop.f32.mrf.mxu0
        %v735 = vpop.f32.mrf.mxu0
        %v736 = vadd.f32 0.0, %v735
        %v737 = vpop.f32.mrf.mxu0
        %738 = vmatprep.mubr.bf16.mxu0 %v549
        %739 = vmatmul.mubr.bf16.gmra.mxu0 %v548
        %v740 = vpop.f32.mrf.mxu0
        %v741 = vadd.f32 0.0, %v740
        %v742 = vpop.f32.mrf.mxu0
        %v743 = vpop.f32.mrf.mxu0
        %v744 = vadd.f32 0.0, %v743
        %v745 = vpop.f32.mrf.mxu0
        %746 = vmatprep.mubr.bf16.mxu0 %v551
        %747 = vmatmul.mubr.bf16.gmra.mxu0 %v550
        %v748 = vpop.f32.mrf.mxu0
        %v749 = vadd.f32 0.0, %v748
        %v750 = vpop.f32.mrf.mxu0
        %v751 = vpop.f32.mrf.mxu0
        %v752 = vadd.f32 0.0, %v751
        %v753 = vpop.f32.mrf.mxu0
        %754 = vmatprep.mubr.bf16.mxu0 %v553
        %755 = vmatmul.mubr.bf16.gmra.mxu0 %v552
        %v756 = vpop.f32.mrf.mxu0
        %v757 = vadd.f32 0.0, %v756
        %v758 = vpop.f32.mrf.mxu0
        %v759 = vpop.f32.mrf.mxu0
        %v760 = vadd.f32 0.0, %v759
        %v761 = vpop.f32.mrf.mxu0
        %762 = vdwg.mxu0
        %v763 = vadd.f32 %v442, %v701
        %v764 = vadd.f32 %v443, %v704
        %v765 = vadd.f32 %v444, %v709
        %v766 = vadd.f32 %v445, %v712
        %v767 = vadd.f32 %v446, %v717
        %v768 = vadd.f32 %v447, %v720
        %v769 = vadd.f32 %v448, %v725
        %v770 = vadd.f32 %v449, %v728
        %v771 = vadd.f32 %v450, %v733
        %v772 = vadd.f32 %v451, %v736
        %v773 = vadd.f32 %v452, %v741
        %v774 = vadd.f32 %v453, %v744
        %v775 = vadd.f32 %v454, %v749
        %v776 = vadd.f32 %v455, %v752
        %v777 = vadd.f32 %v456, %v757
        %v778 = vadd.f32 %v457, %v760
        %779 = vst [vmem:[#allocation2] sm:$0xff] %v763
        %780 = vst [vmem:[#allocation2 + $0x8] sm:$0xff] %v764
        %781 = vst [vmem:[#allocation2 + $0x10] sm:$0xff] %v765
        %782 = vst [vmem:[#allocation2 + $0x18] sm:$0xff] %v766
        %783 = vst [vmem:[#allocation2 + $0x20] sm:$0xff] %v767
        %784 = vst [vmem:[#allocation2 + $0x28] sm:$0xff] %v768
        %785 = vst [vmem:[#allocation2 + $0x30] sm:$0xff] %v769
        %786 = vst [vmem:[#allocation2 + $0x38] sm:$0xff] %v770
        %787 = vst [vmem:[#allocation2 + $0x40] sm:$0xff] %v771
        %788 = vst [vmem:[#allocation2 + $0x48] sm:$0xff] %v772
        %789 = vst [vmem:[#allocation2 + $0x50] sm:$0xff] %v773
        %790 = vst [vmem:[#allocation2 + $0x58] sm:$0xff] %v774
        %791 = vst [vmem:[#allocation2 + $0x60] sm:$0xff] %v775
        %792 = vst [vmem:[#allocation2 + $0x68] sm:$0xff] %v776
        %793 = vst [vmem:[#allocation2 + $0x70] sm:$0xff] %v777
        %794 = vst [vmem:[#allocation2 + $0x78] sm:$0xff] %v778
        %s795 = scalar_lea.vmem %s338, 128 [#allocation4]
        %v796 = vld [vmem:[%s795] sm:$0xff]
        %v797 = vld [vmem:[%s795 + $0x8] sm:$0xff]
        %v798 = vld [vmem:[%s795 + $0x10] sm:$0xff]
        %v799 = vld [vmem:[%s795 + $0x18] sm:$0xff]
        %v800 = vld [vmem:[%s795 + $0x20] sm:$0xff]
        %v801 = vld [vmem:[%s795 + $0x28] sm:$0xff]
        %v802 = vld [vmem:[%s795 + $0x30] sm:$0xff]
        %v803 = vld [vmem:[%s795 + $0x38] sm:$0xff]
        %v804 = vld [vmem:[%s795 + $0x40] sm:$0xff]
        %v805 = vld [vmem:[%s795 + $0x48] sm:$0xff]
        %v806 = vld [vmem:[%s795 + $0x50] sm:$0xff]
        %v807 = vld [vmem:[%s795 + $0x58] sm:$0xff]
        %v808 = vld [vmem:[%s795 + $0x60] sm:$0xff]
        %v809 = vld [vmem:[%s795 + $0x68] sm:$0xff]
        %v810 = vld [vmem:[%s795 + $0x70] sm:$0xff]
        %v811 = vld [vmem:[%s795 + $0x78] sm:$0xff]
        %v812 = vld [vmem:[#allocation2] sm:$0xff]
        %v813 = vld [vmem:[#allocation2 + $0x8] sm:$0xff]
        %v814 = vld [vmem:[#allocation2 + $0x10] sm:$0xff]
        %v815 = vld [vmem:[#allocation2 + $0x18] sm:$0xff]
        %v816 = vld [vmem:[#allocation2 + $0x20] sm:$0xff]
        %v817 = vld [vmem:[#allocation2 + $0x28] sm:$0xff]
        %v818 = vld [vmem:[#allocation2 + $0x30] sm:$0xff]
        %v819 = vld [vmem:[#allocation2 + $0x38] sm:$0xff]
        %v820 = vld [vmem:[#allocation2 + $0x40] sm:$0xff]
        %v821 = vld [vmem:[#allocation2 + $0x48] sm:$0xff]
        %v822 = vld [vmem:[#allocation2 + $0x50] sm:$0xff]
        %v823 = vld [vmem:[#allocation2 + $0x58] sm:$0xff]
        %v824 = vld [vmem:[#allocation2 + $0x60] sm:$0xff]
        %v825 = vld [vmem:[#allocation2 + $0x68] sm:$0xff]
        %v826 = vld [vmem:[#allocation2 + $0x70] sm:$0xff]
        %v827 = vld [vmem:[#allocation2 + $0x78] sm:$0xff]
        %s828 = scalar_lea.vmem [#allocation7], 128
        %v829 = vld [vmem:[%s828] sm:$0xf]
        %v830 = vld [vmem:[%s828 + $0x4] sm:$0xf]
        %v831 = vld [vmem:[%s828 + $0x8] sm:$0xf]
        %v832 = vld [vmem:[%s828 + $0xc] sm:$0xf]
        %v833 = vld [vmem:[%s828 + $0x10] sm:$0xf]
        %v834 = vld [vmem:[%s828 + $0x14] sm:$0xf]
        %v835 = vld [vmem:[%s828 + $0x18] sm:$0xf]
        %v836 = vld [vmem:[%s828 + $0x1c] sm:$0xf]
        %v837 = vld [vmem:[%s828 + $0x20] sm:$0xf]
        %v838 = vld [vmem:[%s828 + $0x24] sm:$0xf]
        %v839 = vld [vmem:[%s828 + $0x28] sm:$0xf]
        %v840 = vld [vmem:[%s828 + $0x2c] sm:$0xf]
        %v841 = vld [vmem:[%s828 + $0x30] sm:$0xf]
        %v842 = vld [vmem:[%s828 + $0x34] sm:$0xf]
        %v843 = vld [vmem:[%s828 + $0x38] sm:$0xf]
        %v844 = vld [vmem:[%s828 + $0x3c] sm:$0xf]
        %v845 = vld [vmem:[%s828 + $0x40] sm:$0xf]
        %v846 = vld [vmem:[%s828 + $0x44] sm:$0xf]
        %v847 = vld [vmem:[%s828 + $0x48] sm:$0xf]
        %v848 = vld [vmem:[%s828 + $0x4c] sm:$0xf]
        %v849 = vld [vmem:[%s828 + $0x50] sm:$0xf]
        %v850 = vld [vmem:[%s828 + $0x54] sm:$0xf]
        %v851 = vld [vmem:[%s828 + $0x58] sm:$0xf]
        %v852 = vld [vmem:[%s828 + $0x5c] sm:$0xf]
        %v853 = vld [vmem:[%s828 + $0x60] sm:$0xf]
        %v854 = vld [vmem:[%s828 + $0x64] sm:$0xf]
        %v855 = vld [vmem:[%s828 + $0x68] sm:$0xf]
        %v856 = vld [vmem:[%s828 + $0x6c] sm:$0xf]
        %v857 = vld [vmem:[%s828 + $0x70] sm:$0xf]
        %v858 = vld [vmem:[%s828 + $0x74] sm:$0xf]
        %v859 = vld [vmem:[%s828 + $0x78] sm:$0xf]
        %v860 = vld [vmem:[%s828 + $0x7c] sm:$0xf]
        %v877 = vunpack.c.l.b16 %v796
        %v878 = vunpack.c.h.b16 %v796
        %v879 = vunpack.c.l.b16 %v797
        %v880 = vunpack.c.h.b16 %v797
        %v881 = vunpack.c.l.b16 %v798
        %v882 = vunpack.c.h.b16 %v798
        %v883 = vunpack.c.l.b16 %v799
        %v884 = vunpack.c.h.b16 %v799
        %v885 = vunpack.c.l.b16 %v800
        %v886 = vunpack.c.h.b16 %v800
        %v887 = vunpack.c.l.b16 %v801
        %v888 = vunpack.c.h.b16 %v801
        %v889 = vunpack.c.l.b16 %v802
        %v890 = vunpack.c.h.b16 %v802
        %v891 = vunpack.c.l.b16 %v803
        %v892 = vunpack.c.h.b16 %v803
        %v893 = vunpack.c.l.b16 %v804
        %v894 = vunpack.c.h.b16 %v804
        %v895 = vunpack.c.l.b16 %v805
        %v896 = vunpack.c.h.b16 %v805
        %v897 = vunpack.c.l.b16 %v806
        %v898 = vunpack.c.h.b16 %v806
        %v899 = vunpack.c.l.b16 %v807
        %v900 = vunpack.c.h.b16 %v807
        %v901 = vunpack.c.l.b16 %v808
        %v902 = vunpack.c.h.b16 %v808
        %v903 = vunpack.c.l.b16 %v809
        %v904 = vunpack.c.h.b16 %v809
        %v905 = vunpack.c.l.b16 %v810
        %v906 = vunpack.c.h.b16 %v810
        %v907 = vunpack.c.l.b16 %v811
        %v908 = vunpack.c.h.b16 %v811
        %v909 = vpack.c.b16 %v879, %v877
        %v910 = vpack.c.b16 %v880, %v878
        %v911 = vpack.c.b16 %v883, %v881
        %v912 = vpack.c.b16 %v884, %v882
        %v913 = vpack.c.b16 %v887, %v885
        %v914 = vpack.c.b16 %v888, %v886
        %v915 = vpack.c.b16 %v891, %v889
        %v916 = vpack.c.b16 %v892, %v890
        %v917 = vpack.c.b16 %v895, %v893
        %v918 = vpack.c.b16 %v896, %v894
        %v919 = vpack.c.b16 %v899, %v897
        %v920 = vpack.c.b16 %v900, %v898
        %v921 = vpack.c.b16 %v903, %v901
        %v922 = vpack.c.b16 %v904, %v902
        %v923 = vpack.c.b16 %v907, %v905
        %v924 = vpack.c.b16 %v908, %v906
        %v973 = vunpack.c.l.b16 %v829
        %v974 = vunpack.c.l.b16 %v830
        %v975 = vunpack.c.l.b16 %v831
        %v976 = vunpack.c.l.b16 %v832
        %v977 = vunpack.c.l.b16 %v833
        %v978 = vunpack.c.l.b16 %v834
        %v979 = vunpack.c.l.b16 %v835
        %v980 = vunpack.c.l.b16 %v836
        %v981 = vunpack.c.l.b16 %v837
        %v982 = vunpack.c.l.b16 %v838
        %v983 = vunpack.c.l.b16 %v839
        %v984 = vunpack.c.l.b16 %v840
        %v985 = vunpack.c.l.b16 %v841
        %v986 = vunpack.c.l.b16 %v842
        %v987 = vunpack.c.l.b16 %v843
        %v988 = vunpack.c.l.b16 %v844
        %v989 = vunpack.c.l.b16 %v845
        %v990 = vunpack.c.l.b16 %v846
        %v991 = vunpack.c.l.b16 %v847
        %v992 = vunpack.c.l.b16 %v848
        %v993 = vunpack.c.l.b16 %v849
        %v994 = vunpack.c.l.b16 %v850
        %v995 = vunpack.c.l.b16 %v851
        %v996 = vunpack.c.l.b16 %v852
        %v997 = vunpack.c.l.b16 %v853
        %v998 = vunpack.c.l.b16 %v854
        %v999 = vunpack.c.l.b16 %v855
        %v1000 = vunpack.c.l.b16 %v856
        %v1001 = vunpack.c.l.b16 %v857
        %v1002 = vunpack.c.l.b16 %v858
        %v1003 = vunpack.c.l.b16 %v859
        %v1004 = vunpack.c.l.b16 %v860
        %v1005 = vpack.c.b16 %v974, %v973
        %v1006 = vpack.c.b16 %v976, %v975
        %v1007 = vpack.c.b16 %v978, %v977
        %v1008 = vpack.c.b16 %v980, %v979
        %v1009 = vpack.c.b16 %v982, %v981
        %v1010 = vpack.c.b16 %v984, %v983
        %v1011 = vpack.c.b16 %v986, %v985
        %v1012 = vpack.c.b16 %v988, %v987
        %v1013 = vpack.c.b16 %v990, %v989
        %v1014 = vpack.c.b16 %v992, %v991
        %v1015 = vpack.c.b16 %v994, %v993
        %v1016 = vpack.c.b16 %v996, %v995
        %v1017 = vpack.c.b16 %v998, %v997
        %v1018 = vpack.c.b16 %v1000, %v999
        %v1019 = vpack.c.b16 %v1002, %v1001
        %v1020 = vpack.c.b16 %v1004, %v1003
        %1037 = vmatprep.subr.bf16.mxu0 0
        %1038 = vmatpush1.bf16.msra.mxu0 %v1012
        %1039 = vmatprep.subr.bf16.mxu0 0
        %1040 = vmatpush1.bf16.msra.mxu0 %v1011
        %1041 = vmatprep.subr.bf16.mxu0 0
        %1042 = vmatpush1.bf16.msra.mxu0 %v1010
        %1043 = vmatprep.subr.bf16.mxu0 0
        %1044 = vmatpush1.bf16.msra.mxu0 %v1009
        %1045 = vmatprep.subr.bf16.mxu0 0
        %1046 = vmatpush1.bf16.msra.mxu0 %v1008
        %1047 = vmatprep.subr.bf16.mxu0 0
        %1048 = vmatpush1.bf16.msra.mxu0 %v1007
        %1049 = vmatprep.subr.bf16.mxu0 0
        %1050 = vmatpush1.bf16.msra.mxu0 %v1006
        %1051 = vmatprep.subr.bf16.mxu0 0
        %1052 = vmatpush1.bf16.msra.mxu0 %v1005
        %1053 = vmatprep.subr.bf16.mxu0 0
        %1054 = vmatpush2.bf16.msra.mxu0 %v1020
        %1055 = vmatprep.subr.bf16.mxu0 0
        %1056 = vmatpush2.bf16.msra.mxu0 %v1019
        %1057 = vmatprep.subr.bf16.mxu0 0
        %1058 = vmatpush2.bf16.msra.mxu0 %v1018
        %1059 = vmatprep.subr.bf16.mxu0 0
        %1060 = vmatpush2.bf16.msra.mxu0 %v1017
        %1061 = vmatprep.subr.bf16.mxu0 0
        %1062 = vmatpush2.bf16.msra.mxu0 %v1016
        %1063 = vmatprep.subr.bf16.mxu0 0
        %1064 = vmatpush2.bf16.msra.mxu0 %v1015
        %1065 = vmatprep.subr.bf16.mxu0 0
        %1066 = vmatpush2.bf16.msra.mxu0 %v1014
        %1067 = vmatprep.subr.bf16.mxu0 0
        %1068 = vmatpush2.bf16.msra.mxu0 %v1013
        %1069 = vmatprep.mubr.bf16.mxu0 %v910
        %1070 = vmatmul.mubr.bf16.gmra.mxu0 %v909
        %v1071 = vpop.f32.mrf.mxu0
        %v1072 = vadd.f32 0.0, %v1071
        %v1073 = vpop.f32.mrf.mxu0
        %v1074 = vpop.f32.mrf.mxu0
        %v1075 = vadd.f32 0.0, %v1074
        %v1076 = vpop.f32.mrf.mxu0
        %1077 = vmatprep.mubr.bf16.mxu0 %v912
        %1078 = vmatmul.mubr.bf16.gmra.mxu0 %v911
        %v1079 = vpop.f32.mrf.mxu0
        %v1080 = vadd.f32 0.0, %v1079
        %v1081 = vpop.f32.mrf.mxu0
        %v1082 = vpop.f32.mrf.mxu0
        %v1083 = vadd.f32 0.0, %v1082
        %v1084 = vpop.f32.mrf.mxu0
        %1085 = vmatprep.mubr.bf16.mxu0 %v914
        %1086 = vmatmul.mubr.bf16.gmra.mxu0 %v913
        %v1087 = vpop.f32.mrf.mxu0
        %v1088 = vadd.f32 0.0, %v1087
        %v1089 = vpop.f32.mrf.mxu0
        %v1090 = vpop.f32.mrf.mxu0
        %v1091 = vadd.f32 0.0, %v1090
        %v1092 = vpop.f32.mrf.mxu0
        %1093 = vmatprep.mubr.bf16.mxu0 %v916
        %1094 = vmatmul.mubr.bf16.gmra.mxu0 %v915
        %v1095 = vpop.f32.mrf.mxu0
        %v1096 = vadd.f32 0.0, %v1095
        %v1097 = vpop.f32.mrf.mxu0
        %v1098 = vpop.f32.mrf.mxu0
        %v1099 = vadd.f32 0.0, %v1098
        %v1100 = vpop.f32.mrf.mxu0
        %1101 = vmatprep.mubr.bf16.mxu0 %v918
        %1102 = vmatmul.mubr.bf16.gmra.mxu0 %v917
        %v1103 = vpop.f32.mrf.mxu0
        %v1104 = vadd.f32 0.0, %v1103
        %v1105 = vpop.f32.mrf.mxu0
        %v1106 = vpop.f32.mrf.mxu0
        %v1107 = vadd.f32 0.0, %v1106
        %v1108 = vpop.f32.mrf.mxu0
        %1109 = vmatprep.mubr.bf16.mxu0 %v920
        %1110 = vmatmul.mubr.bf16.gmra.mxu0 %v919
        %v1111 = vpop.f32.mrf.mxu0
        %v1112 = vadd.f32 0.0, %v1111
        %v1113 = vpop.f32.mrf.mxu0
        %v1114 = vpop.f32.mrf.mxu0
        %v1115 = vadd.f32 0.0, %v1114
        %v1116 = vpop.f32.mrf.mxu0
        %1117 = vmatprep.mubr.bf16.mxu0 %v922
        %1118 = vmatmul.mubr.bf16.gmra.mxu0 %v921
        %v1119 = vpop.f32.mrf.mxu0
        %v1120 = vadd.f32 0.0, %v1119
        %v1121 = vpop.f32.mrf.mxu0
        %v1122 = vpop.f32.mrf.mxu0
        %v1123 = vadd.f32 0.0, %v1122
        %v1124 = vpop.f32.mrf.mxu0
        %1125 = vmatprep.mubr.bf16.mxu0 %v924
        %1126 = vmatmul.mubr.bf16.gmra.mxu0 %v923
        %v1127 = vpop.f32.mrf.mxu0
        %v1128 = vadd.f32 0.0, %v1127
        %v1129 = vpop.f32.mrf.mxu0
        %v1130 = vpop.f32.mrf.mxu0
        %v1131 = vadd.f32 0.0, %v1130
        %v1132 = vpop.f32.mrf.mxu0
        %1133 = vdwg.mxu0
        %v1134 = vadd.f32 %v812, %v1072
        %v1135 = vadd.f32 %v813, %v1075
        %v1136 = vadd.f32 %v814, %v1080
        %v1137 = vadd.f32 %v815, %v1083
        %v1138 = vadd.f32 %v816, %v1088
        %v1139 = vadd.f32 %v817, %v1091
        %v1140 = vadd.f32 %v818, %v1096
        %v1141 = vadd.f32 %v819, %v1099
        %v1142 = vadd.f32 %v820, %v1104
        %v1143 = vadd.f32 %v821, %v1107
        %v1144 = vadd.f32 %v822, %v1112
        %v1145 = vadd.f32 %v823, %v1115
        %v1146 = vadd.f32 %v824, %v1120
        %v1147 = vadd.f32 %v825, %v1123
        %v1148 = vadd.f32 %v826, %v1128
        %v1149 = vadd.f32 %v827, %v1131
        %1150 = vst [vmem:[#allocation2] sm:$0xff] %v1134
        %1151 = vst [vmem:[#allocation2 + $0x8] sm:$0xff] %v1135
        %1152 = vst [vmem:[#allocation2 + $0x10] sm:$0xff] %v1136
        %1153 = vst [vmem:[#allocation2 + $0x18] sm:$0xff] %v1137
        %1154 = vst [vmem:[#allocation2 + $0x20] sm:$0xff] %v1138
        %1155 = vst [vmem:[#allocation2 + $0x28] sm:$0xff] %v1139
        %1156 = vst [vmem:[#allocation2 + $0x30] sm:$0xff] %v1140
        %1157 = vst [vmem:[#allocation2 + $0x38] sm:$0xff] %v1141
        %1158 = vst [vmem:[#allocation2 + $0x40] sm:$0xff] %v1142
        %1159 = vst [vmem:[#allocation2 + $0x48] sm:$0xff] %v1143
        %1160 = vst [vmem:[#allocation2 + $0x50] sm:$0xff] %v1144
        %1161 = vst [vmem:[#allocation2 + $0x58] sm:$0xff] %v1145
        %1162 = vst [vmem:[#allocation2 + $0x60] sm:$0xff] %v1146
        %1163 = vst [vmem:[#allocation2 + $0x68] sm:$0xff] %v1147
        %1164 = vst [vmem:[#allocation2 + $0x70] sm:$0xff] %v1148
        %1165 = vst [vmem:[#allocation2 + $0x78] sm:$0xff] %v1149
        %v1166 = vadd.bf16 %v426, %v796
        %v1167 = vadd.bf16 %v427, %v797
        %v1168 = vadd.bf16 %v428, %v798
        %v1169 = vadd.bf16 %v429, %v799
        %v1170 = vadd.bf16 %v430, %v800
        %v1171 = vadd.bf16 %v431, %v801
        %v1172 = vadd.bf16 %v432, %v802
        %v1173 = vadd.bf16 %v433, %v803
        %v1174 = vadd.bf16 %v434, %v804
        %v1175 = vadd.bf16 %v435, %v805
        %v1176 = vadd.bf16 %v436, %v806
        %v1177 = vadd.bf16 %v437, %v807
        %v1178 = vadd.bf16 %v438, %v808
        %v1179 = vadd.bf16 %v439, %v809
        %v1180 = vadd.bf16 %v440, %v810
        %v1181 = vadd.bf16 %v441, %v811
        %s1182 = scalar_lea.vmem %s338, 256 [#allocation4]
        %v1183 = vld [vmem:[%s1182] sm:$0xff]
        %v1184 = vld [vmem:[%s1182 + $0x8] sm:$0xff]
        %v1185 = vld [vmem:[%s1182 + $0x10] sm:$0xff]
        %v1186 = vld [vmem:[%s1182 + $0x18] sm:$0xff]
        %v1187 = vld [vmem:[%s1182 + $0x20] sm:$0xff]
        %v1188 = vld [vmem:[%s1182 + $0x28] sm:$0xff]
        %v1189 = vld [vmem:[%s1182 + $0x30] sm:$0xff]
        %v1190 = vld [vmem:[%s1182 + $0x38] sm:$0xff]
        %v1191 = vld [vmem:[%s1182 + $0x40] sm:$0xff]
        %v1192 = vld [vmem:[%s1182 + $0x48] sm:$0xff]
        %v1193 = vld [vmem:[%s1182 + $0x50] sm:$0xff]
        %v1194 = vld [vmem:[%s1182 + $0x58] sm:$0xff]
        %v1195 = vld [vmem:[%s1182 + $0x60] sm:$0xff]
        %v1196 = vld [vmem:[%s1182 + $0x68] sm:$0xff]
        %v1197 = vld [vmem:[%s1182 + $0x70] sm:$0xff]
        %v1198 = vld [vmem:[%s1182 + $0x78] sm:$0xff]
        %v1199 = vld [vmem:[#allocation2] sm:$0xff]
        %v1200 = vld [vmem:[#allocation2 + $0x8] sm:$0xff]
        %v1201 = vld [vmem:[#allocation2 + $0x10] sm:$0xff]
        %v1202 = vld [vmem:[#allocation2 + $0x18] sm:$0xff]
        %v1203 = vld [vmem:[#allocation2 + $0x20] sm:$0xff]
        %v1204 = vld [vmem:[#allocation2 + $0x28] sm:$0xff]
        %v1205 = vld [vmem:[#allocation2 + $0x30] sm:$0xff]
        %v1206 = vld [vmem:[#allocation2 + $0x38] sm:$0xff]
        %v1207 = vld [vmem:[#allocation2 + $0x40] sm:$0xff]
        %v1208 = vld [vmem:[#allocation2 + $0x48] sm:$0xff]
        %v1209 = vld [vmem:[#allocation2 + $0x50] sm:$0xff]
        %v1210 = vld [vmem:[#allocation2 + $0x58] sm:$0xff]
        %v1211 = vld [vmem:[#allocation2 + $0x60] sm:$0xff]
        %v1212 = vld [vmem:[#allocation2 + $0x68] sm:$0xff]
        %v1213 = vld [vmem:[#allocation2 + $0x70] sm:$0xff]
        %v1214 = vld [vmem:[#allocation2 + $0x78] sm:$0xff]
        %s1215 = scalar_lea.vmem [#allocation7], 256
        %v1216 = vld [vmem:[%s1215] sm:$0xf]
        %v1217 = vld [vmem:[%s1215 + $0x4] sm:$0xf]
        %v1218 = vld [vmem:[%s1215 + $0x8] sm:$0xf]
        %v1219 = vld [vmem:[%s1215 + $0xc] sm:$0xf]
        %v1220 = vld [vmem:[%s1215 + $0x10] sm:$0xf]
        %v1221 = vld [vmem:[%s1215 + $0x14] sm:$0xf]
        %v1222 = vld [vmem:[%s1215 + $0x18] sm:$0xf]
        %v1223 = vld [vmem:[%s1215 + $0x1c] sm:$0xf]
        %v1224 = vld [vmem:[%s1215 + $0x20] sm:$0xf]
        %v1225 = vld [vmem:[%s1215 + $0x24] sm:$0xf]
        %v1226 = vld [vmem:[%s1215 + $0x28] sm:$0xf]
        %v1227 = vld [vmem:[%s1215 + $0x2c] sm:$0xf]
        %v1228 = vld [vmem:[%s1215 + $0x30] sm:$0xf]
        %v1229 = vld [vmem:[%s1215 + $0x34] sm:$0xf]
        %v1230 = vld [vmem:[%s1215 + $0x38] sm:$0xf]
        %v1231 = vld [vmem:[%s1215 + $0x3c] sm:$0xf]
        %v1232 = vld [vmem:[%s1215 + $0x40] sm:$0xf]
        %v1233 = vld [vmem:[%s1215 + $0x44] sm:$0xf]
        %v1234 = vld [vmem:[%s1215 + $0x48] sm:$0xf]
        %v1235 = vld [vmem:[%s1215 + $0x4c] sm:$0xf]
        %v1236 = vld [vmem:[%s1215 + $0x50] sm:$0xf]
        %v1237 = vld [vmem:[%s1215 + $0x54] sm:$0xf]
        %v1238 = vld [vmem:[%s1215 + $0x58] sm:$0xf]
        %v1239 = vld [vmem:[%s1215 + $0x5c] sm:$0xf]
        %v1240 = vld [vmem:[%s1215 + $0x60] sm:$0xf]
        %v1241 = vld [vmem:[%s1215 + $0x64] sm:$0xf]
        %v1242 = vld [vmem:[%s1215 + $0x68] sm:$0xf]
        %v1243 = vld [vmem:[%s1215 + $0x6c] sm:$0xf]
        %v1244 = vld [vmem:[%s1215 + $0x70] sm:$0xf]
        %v1245 = vld [vmem:[%s1215 + $0x74] sm:$0xf]
        %v1246 = vld [vmem:[%s1215 + $0x78] sm:$0xf]
        %v1247 = vld [vmem:[%s1215 + $0x7c] sm:$0xf]
        %v1264 = vunpack.c.l.b16 %v1183
        %v1265 = vunpack.c.h.b16 %v1183
        %v1266 = vunpack.c.l.b16 %v1184
        %v1267 = vunpack.c.h.b16 %v1184
        %v1268 = vunpack.c.l.b16 %v1185
        %v1269 = vunpack.c.h.b16 %v1185
        %v1270 = vunpack.c.l.b16 %v1186
        %v1271 = vunpack.c.h.b16 %v1186
        %v1272 = vunpack.c.l.b16 %v1187
        %v1273 = vunpack.c.h.b16 %v1187
        %v1274 = vunpack.c.l.b16 %v1188
        %v1275 = vunpack.c.h.b16 %v1188
        %v1276 = vunpack.c.l.b16 %v1189
        %v1277 = vunpack.c.h.b16 %v1189
        %v1278 = vunpack.c.l.b16 %v1190
        %v1279 = vunpack.c.h.b16 %v1190
        %v1280 = vunpack.c.l.b16 %v1191
        %v1281 = vunpack.c.h.b16 %v1191
        %v1282 = vunpack.c.l.b16 %v1192
        %v1283 = vunpack.c.h.b16 %v1192
        %v1284 = vunpack.c.l.b16 %v1193
        %v1285 = vunpack.c.h.b16 %v1193
        %v1286 = vunpack.c.l.b16 %v1194
        %v1287 = vunpack.c.h.b16 %v1194
        %v1288 = vunpack.c.l.b16 %v1195
        %v1289 = vunpack.c.h.b16 %v1195
        %v1290 = vunpack.c.l.b16 %v1196
        %v1291 = vunpack.c.h.b16 %v1196
        %v1292 = vunpack.c.l.b16 %v1197
        %v1293 = vunpack.c.h.b16 %v1197
        %v1294 = vunpack.c.l.b16 %v1198
        %v1295 = vunpack.c.h.b16 %v1198
        %v1296 = vpack.c.b16 %v1266, %v1264
        %v1297 = vpack.c.b16 %v1267, %v1265
        %v1298 = vpack.c.b16 %v1270, %v1268
        %v1299 = vpack.c.b16 %v1271, %v1269
        %v1300 = vpack.c.b16 %v1274, %v1272
        %v1301 = vpack.c.b16 %v1275, %v1273
        %v1302 = vpack.c.b16 %v1278, %v1276
        %v1303 = vpack.c.b16 %v1279, %v1277
        %v1304 = vpack.c.b16 %v1282, %v1280
        %v1305 = vpack.c.b16 %v1283, %v1281
        %v1306 = vpack.c.b16 %v1286, %v1284
        %v1307 = vpack.c.b16 %v1287, %v1285
        %v1308 = vpack.c.b16 %v1290, %v1288
        %v1309 = vpack.c.b16 %v1291, %v1289
        %v1310 = vpack.c.b16 %v1294, %v1292
        %v1311 = vpack.c.b16 %v1295, %v1293
        %v1360 = vunpack.c.l.b16 %v1216
        %v1361 = vunpack.c.l.b16 %v1217
        %v1362 = vunpack.c.l.b16 %v1218
        %v1363 = vunpack.c.l.b16 %v1219
        %v1364 = vunpack.c.l.b16 %v1220
        %v1365 = vunpack.c.l.b16 %v1221
        %v1366 = vunpack.c.l.b16 %v1222
        %v1367 = vunpack.c.l.b16 %v1223
        %v1368 = vunpack.c.l.b16 %v1224
        %v1369 = vunpack.c.l.b16 %v1225
        %v1370 = vunpack.c.l.b16 %v1226
        %v1371 = vunpack.c.l.b16 %v1227
        %v1372 = vunpack.c.l.b16 %v1228
        %v1373 = vunpack.c.l.b16 %v1229
        %v1374 = vunpack.c.l.b16 %v1230
        %v1375 = vunpack.c.l.b16 %v1231
        %v1376 = vunpack.c.l.b16 %v1232
        %v1377 = vunpack.c.l.b16 %v1233
        %v1378 = vunpack.c.l.b16 %v1234
        %v1379 = vunpack.c.l.b16 %v1235
        %v1380 = vunpack.c.l.b16 %v1236
        %v1381 = vunpack.c.l.b16 %v1237
        %v1382 = vunpack.c.l.b16 %v1238
        %v1383 = vunpack.c.l.b16 %v1239
        %v1384 = vunpack.c.l.b16 %v1240
        %v1385 = vunpack.c.l.b16 %v1241
        %v1386 = vunpack.c.l.b16 %v1242
        %v1387 = vunpack.c.l.b16 %v1243
        %v1388 = vunpack.c.l.b16 %v1244
        %v1389 = vunpack.c.l.b16 %v1245
        %v1390 = vunpack.c.l.b16 %v1246
        %v1391 = vunpack.c.l.b16 %v1247
        %v1392 = vpack.c.b16 %v1361, %v1360
        %v1393 = vpack.c.b16 %v1363, %v1362
        %v1394 = vpack.c.b16 %v1365, %v1364
        %v1395 = vpack.c.b16 %v1367, %v1366
        %v1396 = vpack.c.b16 %v1369, %v1368
        %v1397 = vpack.c.b16 %v1371, %v1370
        %v1398 = vpack.c.b16 %v1373, %v1372
        %v1399 = vpack.c.b16 %v1375, %v1374
        %v1400 = vpack.c.b16 %v1377, %v1376
        %v1401 = vpack.c.b16 %v1379, %v1378
        %v1402 = vpack.c.b16 %v1381, %v1380
        %v1403 = vpack.c.b16 %v1383, %v1382
        %v1404 = vpack.c.b16 %v1385, %v1384
        %v1405 = vpack.c.b16 %v1387, %v1386
        %v1406 = vpack.c.b16 %v1389, %v1388
        %v1407 = vpack.c.b16 %v1391, %v1390
        %1424 = vmatprep.subr.bf16.mxu0 0
        %1425 = vmatpush1.bf16.msra.mxu0 %v1399
        %1426 = vmatprep.subr.bf16.mxu0 0
        %1427 = vmatpush1.bf16.msra.mxu0 %v1398
        %1428 = vmatprep.subr.bf16.mxu0 0
        %1429 = vmatpush1.bf16.msra.mxu0 %v1397
        %1430 = vmatprep.subr.bf16.mxu0 0
        %1431 = vmatpush1.bf16.msra.mxu0 %v1396
        %1432 = vmatprep.subr.bf16.mxu0 0
        %1433 = vmatpush1.bf16.msra.mxu0 %v1395
        %1434 = vmatprep.subr.bf16.mxu0 0
        %1435 = vmatpush1.bf16.msra.mxu0 %v1394
        %1436 = vmatprep.subr.bf16.mxu0 0
        %1437 = vmatpush1.bf16.msra.mxu0 %v1393
        %1438 = vmatprep.subr.bf16.mxu0 0
        %1439 = vmatpush1.bf16.msra.mxu0 %v1392
        %1440 = vmatprep.subr.bf16.mxu0 0
        %1441 = vmatpush2.bf16.msra.mxu0 %v1407
        %1442 = vmatprep.subr.bf16.mxu0 0
        %1443 = vmatpush2.bf16.msra.mxu0 %v1406
        %1444 = vmatprep.subr.bf16.mxu0 0
        %1445 = vmatpush2.bf16.msra.mxu0 %v1405
        %1446 = vmatprep.subr.bf16.mxu0 0
        %1447 = vmatpush2.bf16.msra.mxu0 %v1404
        %1448 = vmatprep.subr.bf16.mxu0 0
        %1449 = vmatpush2.bf16.msra.mxu0 %v1403
        %1450 = vmatprep.subr.bf16.mxu0 0
        %1451 = vmatpush2.bf16.msra.mxu0 %v1402
        %1452 = vmatprep.subr.bf16.mxu0 0
        %1453 = vmatpush2.bf16.msra.mxu0 %v1401
        %1454 = vmatprep.subr.bf16.mxu0 0
        %1455 = vmatpush2.bf16.msra.mxu0 %v1400
        %1456 = vmatprep.mubr.bf16.mxu0 %v1297
        %1457 = vmatmul.mubr.bf16.gmra.mxu0 %v1296
        %v1458 = vpop.f32.mrf.mxu0
        %v1459 = vadd.f32 0.0, %v1458
        %v1460 = vpop.f32.mrf.mxu0
        %v1461 = vpop.f32.mrf.mxu0
        %v1462 = vadd.f32 0.0, %v1461
        %v1463 = vpop.f32.mrf.mxu0
        %1464 = vmatprep.mubr.bf16.mxu0 %v1299
        %1465 = vmatmul.mubr.bf16.gmra.mxu0 %v1298
        %v1466 = vpop.f32.mrf.mxu0
        %v1467 = vadd.f32 0.0, %v1466
        %v1468 = vpop.f32.mrf.mxu0
        %v1469 = vpop.f32.mrf.mxu0
        %v1470 = vadd.f32 0.0, %v1469
        %v1471 = vpop.f32.mrf.mxu0
        %1472 = vmatprep.mubr.bf16.mxu0 %v1301
        %1473 = vmatmul.mubr.bf16.gmra.mxu0 %v1300
        %v1474 = vpop.f32.mrf.mxu0
        %v1475 = vadd.f32 0.0, %v1474
        %v1476 = vpop.f32.mrf.mxu0
        %v1477 = vpop.f32.mrf.mxu0
        %v1478 = vadd.f32 0.0, %v1477
        %v1479 = vpop.f32.mrf.mxu0
        %1480 = vmatprep.mubr.bf16.mxu0 %v1303
        %1481 = vmatmul.mubr.bf16.gmra.mxu0 %v1302
        %v1482 = vpop.f32.mrf.mxu0
        %v1483 = vadd.f32 0.0, %v1482
        %v1484 = vpop.f32.mrf.mxu0
        %v1485 = vpop.f32.mrf.mxu0
        %v1486 = vadd.f32 0.0, %v1485
        %v1487 = vpop.f32.mrf.mxu0
        %1488 = vmatprep.mubr.bf16.mxu0 %v1305
        %1489 = vmatmul.mubr.bf16.gmra.mxu0 %v1304
        %v1490 = vpop.f32.mrf.mxu0
        %v1491 = vadd.f32 0.0, %v1490
        %v1492 = vpop.f32.mrf.mxu0
        %v1493 = vpop.f32.mrf.mxu0
        %v1494 = vadd.f32 0.0, %v1493
        %v1495 = vpop.f32.mrf.mxu0
        %1496 = vmatprep.mubr.bf16.mxu0 %v1307
        %1497 = vmatmul.mubr.bf16.gmra.mxu0 %v1306
        %v1498 = vpop.f32.mrf.mxu0
        %v1499 = vadd.f32 0.0, %v1498
        %v1500 = vpop.f32.mrf.mxu0
        %v1501 = vpop.f32.mrf.mxu0
        %v1502 = vadd.f32 0.0, %v1501
        %v1503 = vpop.f32.mrf.mxu0
        %1504 = vmatprep.mubr.bf16.mxu0 %v1309
        %1505 = vmatmul.mubr.bf16.gmra.mxu0 %v1308
        %v1506 = vpop.f32.mrf.mxu0
        %v1507 = vadd.f32 0.0, %v1506
        %v1508 = vpop.f32.mrf.mxu0
        %v1509 = vpop.f32.mrf.mxu0
        %v1510 = vadd.f32 0.0, %v1509
        %v1511 = vpop.f32.mrf.mxu0
        %1512 = vmatprep.mubr.bf16.mxu0 %v1311
        %1513 = vmatmul.mubr.bf16.gmra.mxu0 %v1310
        %v1514 = vpop.f32.mrf.mxu0
        %v1515 = vadd.f32 0.0, %v1514
        %v1516 = vpop.f32.mrf.mxu0
        %v1517 = vpop.f32.mrf.mxu0
        %v1518 = vadd.f32 0.0, %v1517
        %v1519 = vpop.f32.mrf.mxu0
        %1520 = vdwg.mxu0
        %v1521 = vadd.f32 %v1199, %v1459
        %v1522 = vadd.f32 %v1200, %v1462
        %v1523 = vadd.f32 %v1201, %v1467
        %v1524 = vadd.f32 %v1202, %v1470
        %v1525 = vadd.f32 %v1203, %v1475
        %v1526 = vadd.f32 %v1204, %v1478
        %v1527 = vadd.f32 %v1205, %v1483
        %v1528 = vadd.f32 %v1206, %v1486
        %v1529 = vadd.f32 %v1207, %v1491
        %v1530 = vadd.f32 %v1208, %v1494
        %v1531 = vadd.f32 %v1209, %v1499
        %v1532 = vadd.f32 %v1210, %v1502
        %v1533 = vadd.f32 %v1211, %v1507
        %v1534 = vadd.f32 %v1212, %v1510
        %v1535 = vadd.f32 %v1213, %v1515
        %v1536 = vadd.f32 %v1214, %v1518
        %1537 = vst [vmem:[#allocation2] sm:$0xff] %v1521
        %1538 = vst [vmem:[#allocation2 + $0x8] sm:$0xff] %v1522
        %1539 = vst [vmem:[#allocation2 + $0x10] sm:$0xff] %v1523
        %1540 = vst [vmem:[#allocation2 + $0x18] sm:$0xff] %v1524
        %1541 = vst [vmem:[#allocation2 + $0x20] sm:$0xff] %v1525
        %1542 = vst [vmem:[#allocation2 + $0x28] sm:$0xff] %v1526
        %1543 = vst [vmem:[#allocation2 + $0x30] sm:$0xff] %v1527
        %1544 = vst [vmem:[#allocation2 + $0x38] sm:$0xff] %v1528
        %1545 = vst [vmem:[#allocation2 + $0x40] sm:$0xff] %v1529
        %1546 = vst [vmem:[#allocation2 + $0x48] sm:$0xff] %v1530
        %1547 = vst [vmem:[#allocation2 + $0x50] sm:$0xff] %v1531
        %1548 = vst [vmem:[#allocation2 + $0x58] sm:$0xff] %v1532
        %1549 = vst [vmem:[#allocation2 + $0x60] sm:$0xff] %v1533
        %1550 = vst [vmem:[#allocation2 + $0x68] sm:$0xff] %v1534
        %1551 = vst [vmem:[#allocation2 + $0x70] sm:$0xff] %v1535
        %1552 = vst [vmem:[#allocation2 + $0x78] sm:$0xff] %v1536
        %v1553 = vadd.bf16 %v1166, %v1183
        %v1554 = vadd.bf16 %v1167, %v1184
        %v1555 = vadd.bf16 %v1168, %v1185
        %v1556 = vadd.bf16 %v1169, %v1186
        %v1557 = vadd.bf16 %v1170, %v1187
        %v1558 = vadd.bf16 %v1171, %v1188
        %v1559 = vadd.bf16 %v1172, %v1189
        %v1560 = vadd.bf16 %v1173, %v1190
        %v1561 = vadd.bf16 %v1174, %v1191
        %v1562 = vadd.bf16 %v1175, %v1192
        %v1563 = vadd.bf16 %v1176, %v1193
        %v1564 = vadd.bf16 %v1177, %v1194
        %v1565 = vadd.bf16 %v1178, %v1195
        %v1566 = vadd.bf16 %v1179, %v1196
        %v1567 = vadd.bf16 %v1180, %v1197
        %v1568 = vadd.bf16 %v1181, %v1198
        %v1569 = vld [vmem:[#allocation3] sm:$0xff]
        %v1570 = vld [vmem:[#allocation3 + $0x8] sm:$0xff]
        %v1571 = vld [vmem:[#allocation3 + $0x10] sm:$0xff]
        %v1572 = vld [vmem:[#allocation3 + $0x18] sm:$0xff]
        %v1573 = vld [vmem:[#allocation3 + $0x20] sm:$0xff]
        %v1574 = vld [vmem:[#allocation3 + $0x28] sm:$0xff]
        %v1575 = vld [vmem:[#allocation3 + $0x30] sm:$0xff]
        %v1576 = vld [vmem:[#allocation3 + $0x38] sm:$0xff]
        %v1577 = vld [vmem:[#allocation3 + $0x40] sm:$0xff]
        %v1578 = vld [vmem:[#allocation3 + $0x48] sm:$0xff]
        %v1579 = vld [vmem:[#allocation3 + $0x50] sm:$0xff]
        %v1580 = vld [vmem:[#allocation3 + $0x58] sm:$0xff]
        %v1581 = vld [vmem:[#allocation3 + $0x60] sm:$0xff]
        %v1582 = vld [vmem:[#allocation3 + $0x68] sm:$0xff]
        %v1583 = vld [vmem:[#allocation3 + $0x70] sm:$0xff]
        %v1584 = vld [vmem:[#allocation3 + $0x78] sm:$0xff]
        %v1585 = vld [vmem:[%s384] sm:$0xf]
        %v1586 = vld [vmem:[%s384 + $0x4] sm:$0xf]
        %v1587 = vld [vmem:[%s384 + $0x8] sm:$0xf]
        %v1588 = vld [vmem:[%s384 + $0xc] sm:$0xf]
        %v1589 = vld [vmem:[%s384 + $0x10] sm:$0xf]
        %v1590 = vld [vmem:[%s384 + $0x14] sm:$0xf]
        %v1591 = vld [vmem:[%s384 + $0x18] sm:$0xf]
        %v1592 = vld [vmem:[%s384 + $0x1c] sm:$0xf]
        %v1593 = vld [vmem:[%s384 + $0x20] sm:$0xf]
        %v1594 = vld [vmem:[%s384 + $0x24] sm:$0xf]
        %v1595 = vld [vmem:[%s384 + $0x28] sm:$0xf]
        %v1596 = vld [vmem:[%s384 + $0x2c] sm:$0xf]
        %v1597 = vld [vmem:[%s384 + $0x30] sm:$0xf]
        %v1598 = vld [vmem:[%s384 + $0x34] sm:$0xf]
        %v1599 = vld [vmem:[%s384 + $0x38] sm:$0xf]
        %v1600 = vld [vmem:[%s384 + $0x3c] sm:$0xf]
        %v1601 = vld [vmem:[%s384 + $0x40] sm:$0xf]
        %v1602 = vld [vmem:[%s384 + $0x44] sm:$0xf]
        %v1603 = vld [vmem:[%s384 + $0x48] sm:$0xf]
        %v1604 = vld [vmem:[%s384 + $0x4c] sm:$0xf]
        %v1605 = vld [vmem:[%s384 + $0x50] sm:$0xf]
        %v1606 = vld [vmem:[%s384 + $0x54] sm:$0xf]
        %v1607 = vld [vmem:[%s384 + $0x58] sm:$0xf]
        %v1608 = vld [vmem:[%s384 + $0x5c] sm:$0xf]
        %v1609 = vld [vmem:[%s384 + $0x60] sm:$0xf]
        %v1610 = vld [vmem:[%s384 + $0x64] sm:$0xf]
        %v1611 = vld [vmem:[%s384 + $0x68] sm:$0xf]
        %v1612 = vld [vmem:[%s384 + $0x6c] sm:$0xf]
        %v1613 = vld [vmem:[%s384 + $0x70] sm:$0xf]
        %v1614 = vld [vmem:[%s384 + $0x74] sm:$0xf]
        %v1615 = vld [vmem:[%s384 + $0x78] sm:$0xf]
        %v1616 = vld [vmem:[%s384 + $0x7c] sm:$0xf]
        %v1633 = vunpack.c.l.b16 %v1553
        %v1634 = vunpack.c.h.b16 %v1553
        %v1635 = vunpack.c.l.b16 %v1554
        %v1636 = vunpack.c.h.b16 %v1554
        %v1637 = vunpack.c.l.b16 %v1555
        %v1638 = vunpack.c.h.b16 %v1555
        %v1639 = vunpack.c.l.b16 %v1556
        %v1640 = vunpack.c.h.b16 %v1556
        %v1641 = vunpack.c.l.b16 %v1557
        %v1642 = vunpack.c.h.b16 %v1557
        %v1643 = vunpack.c.l.b16 %v1558
        %v1644 = vunpack.c.h.b16 %v1558
        %v1645 = vunpack.c.l.b16 %v1559
        %v1646 = vunpack.c.h.b16 %v1559
        %v1647 = vunpack.c.l.b16 %v1560
        %v1648 = vunpack.c.h.b16 %v1560
        %v1649 = vunpack.c.l.b16 %v1561
        %v1650 = vunpack.c.h.b16 %v1561
        %v1651 = vunpack.c.l.b16 %v1562
        %v1652 = vunpack.c.h.b16 %v1562
        %v1653 = vunpack.c.l.b16 %v1563
        %v1654 = vunpack.c.h.b16 %v1563
        %v1655 = vunpack.c.l.b16 %v1564
        %v1656 = vunpack.c.h.b16 %v1564
        %v1657 = vunpack.c.l.b16 %v1565
        %v1658 = vunpack.c.h.b16 %v1565
        %v1659 = vunpack.c.l.b16 %v1566
        %v1660 = vunpack.c.h.b16 %v1566
        %v1661 = vunpack.c.l.b16 %v1567
        %v1662 = vunpack.c.h.b16 %v1567
        %v1663 = vunpack.c.l.b16 %v1568
        %v1664 = vunpack.c.h.b16 %v1568
        %v1665 = vpack.c.b16 %v1635, %v1633
        %v1666 = vpack.c.b16 %v1636, %v1634
        %v1667 = vpack.c.b16 %v1639, %v1637
        %v1668 = vpack.c.b16 %v1640, %v1638
        %v1669 = vpack.c.b16 %v1643, %v1641
        %v1670 = vpack.c.b16 %v1644, %v1642
        %v1671 = vpack.c.b16 %v1647, %v1645
        %v1672 = vpack.c.b16 %v1648, %v1646
        %v1673 = vpack.c.b16 %v1651, %v1649
        %v1674 = vpack.c.b16 %v1652, %v1650
        %v1675 = vpack.c.b16 %v1655, %v1653
        %v1676 = vpack.c.b16 %v1656, %v1654
        %v1677 = vpack.c.b16 %v1659, %v1657
        %v1678 = vpack.c.b16 %v1660, %v1658
        %v1679 = vpack.c.b16 %v1663, %v1661
        %v1680 = vpack.c.b16 %v1664, %v1662
        %v1729 = vunpack.c.l.b16 %v1585
        %v1730 = vunpack.c.l.b16 %v1586
        %v1731 = vunpack.c.l.b16 %v1587
        %v1732 = vunpack.c.l.b16 %v1588
        %v1733 = vunpack.c.l.b16 %v1589
        %v1734 = vunpack.c.l.b16 %v1590
        %v1735 = vunpack.c.l.b16 %v1591
        %v1736 = vunpack.c.l.b16 %v1592
        %v1737 = vunpack.c.l.b16 %v1593
        %v1738 = vunpack.c.l.b16 %v1594
        %v1739 = vunpack.c.l.b16 %v1595
        %v1740 = vunpack.c.l.b16 %v1596
        %v1741 = vunpack.c.l.b16 %v1597
        %v1742 = vunpack.c.l.b16 %v1598
        %v1743 = vunpack.c.l.b16 %v1599
        %v1744 = vunpack.c.l.b16 %v1600
        %v1745 = vunpack.c.l.b16 %v1601
        %v1746 = vunpack.c.l.b16 %v1602
        %v1747 = vunpack.c.l.b16 %v1603
        %v1748 = vunpack.c.l.b16 %v1604
        %v1749 = vunpack.c.l.b16 %v1605
        %v1750 = vunpack.c.l.b16 %v1606
        %v1751 = vunpack.c.l.b16 %v1607
        %v1752 = vunpack.c.l.b16 %v1608
        %v1753 = vunpack.c.l.b16 %v1609
        %v1754 = vunpack.c.l.b16 %v1610
        %v1755 = vunpack.c.l.b16 %v1611
        %v1756 = vunpack.c.l.b16 %v1612
        %v1757 = vunpack.c.l.b16 %v1613
        %v1758 = vunpack.c.l.b16 %v1614
        %v1759 = vunpack.c.l.b16 %v1615
        %v1760 = vunpack.c.l.b16 %v1616
        %v1761 = vpack.c.b16 %v1730, %v1729
        %v1762 = vpack.c.b16 %v1732, %v1731
        %v1763 = vpack.c.b16 %v1734, %v1733
        %v1764 = vpack.c.b16 %v1736, %v1735
        %v1765 = vpack.c.b16 %v1738, %v1737
        %v1766 = vpack.c.b16 %v1740, %v1739
        %v1767 = vpack.c.b16 %v1742, %v1741
        %v1768 = vpack.c.b16 %v1744, %v1743
        %v1769 = vpack.c.b16 %v1746, %v1745
        %v1770 = vpack.c.b16 %v1748, %v1747
        %v1771 = vpack.c.b16 %v1750, %v1749
        %v1772 = vpack.c.b16 %v1752, %v1751
        %v1773 = vpack.c.b16 %v1754, %v1753
        %v1774 = vpack.c.b16 %v1756, %v1755
        %v1775 = vpack.c.b16 %v1758, %v1757
        %v1776 = vpack.c.b16 %v1760, %v1759
        %1793 = vmatprep.subr.bf16.mxu0 0
        %1794 = vmatpush1.bf16.msra.mxu0 %v1768
        %1795 = vmatprep.subr.bf16.mxu0 0
        %1796 = vmatpush1.bf16.msra.mxu0 %v1767
        %1797 = vmatprep.subr.bf16.mxu0 0
        %1798 = vmatpush1.bf16.msra.mxu0 %v1766
        %1799 = vmatprep.subr.bf16.mxu0 0
        %1800 = vmatpush1.bf16.msra.mxu0 %v1765
        %1801 = vmatprep.subr.bf16.mxu0 0
        %1802 = vmatpush1.bf16.msra.mxu0 %v1764
        %1803 = vmatprep.subr.bf16.mxu0 0
        %1804 = vmatpush1.bf16.msra.mxu0 %v1763
        %1805 = vmatprep.subr.bf16.mxu0 0
        %1806 = vmatpush1.bf16.msra.mxu0 %v1762
        %1807 = vmatprep.subr.bf16.mxu0 0
        %1808 = vmatpush1.bf16.msra.mxu0 %v1761
        %1809 = vmatprep.subr.bf16.mxu0 0
        %1810 = vmatpush2.bf16.msra.mxu0 %v1776
        %1811 = vmatprep.subr.bf16.mxu0 0
        %1812 = vmatpush2.bf16.msra.mxu0 %v1775
        %1813 = vmatprep.subr.bf16.mxu0 0
        %1814 = vmatpush2.bf16.msra.mxu0 %v1774
        %1815 = vmatprep.subr.bf16.mxu0 0
        %1816 = vmatpush2.bf16.msra.mxu0 %v1773
        %1817 = vmatprep.subr.bf16.mxu0 0
        %1818 = vmatpush2.bf16.msra.mxu0 %v1772
        %1819 = vmatprep.subr.bf16.mxu0 0
        %1820 = vmatpush2.bf16.msra.mxu0 %v1771
        %1821 = vmatprep.subr.bf16.mxu0 0
        %1822 = vmatpush2.bf16.msra.mxu0 %v1770
        %1823 = vmatprep.subr.bf16.mxu0 0
        %1824 = vmatpush2.bf16.msra.mxu0 %v1769
        %1825 = vmatprep.mubr.bf16.mxu0 %v1666
        %1826 = vmatmul.mubr.bf16.gmra.mxu0 %v1665
        %v1827 = vpop.f32.mrf.mxu0
        %v1828 = vadd.f32 0.0, %v1827
        %v1829 = vpop.f32.mrf.mxu0
        %v1830 = vpop.f32.mrf.mxu0
        %v1831 = vadd.f32 0.0, %v1830
        %v1832 = vpop.f32.mrf.mxu0
        %1833 = vmatprep.mubr.bf16.mxu0 %v1668
        %1834 = vmatmul.mubr.bf16.gmra.mxu0 %v1667
        %v1835 = vpop.f32.mrf.mxu0
        %v1836 = vadd.f32 0.0, %v1835
        %v1837 = vpop.f32.mrf.mxu0
        %v1838 = vpop.f32.mrf.mxu0
        %v1839 = vadd.f32 0.0, %v1838
        %v1840 = vpop.f32.mrf.mxu0
        %1841 = vmatprep.mubr.bf16.mxu0 %v1670
        %1842 = vmatmul.mubr.bf16.gmra.mxu0 %v1669
        %v1843 = vpop.f32.mrf.mxu0
        %v1844 = vadd.f32 0.0, %v1843
        %v1845 = vpop.f32.mrf.mxu0
        %v1846 = vpop.f32.mrf.mxu0
        %v1847 = vadd.f32 0.0, %v1846
        %v1848 = vpop.f32.mrf.mxu0
        %1849 = vmatprep.mubr.bf16.mxu0 %v1672
        %1850 = vmatmul.mubr.bf16.gmra.mxu0 %v1671
        %v1851 = vpop.f32.mrf.mxu0
        %v1852 = vadd.f32 0.0, %v1851
        %v1853 = vpop.f32.mrf.mxu0
        %v1854 = vpop.f32.mrf.mxu0
        %v1855 = vadd.f32 0.0, %v1854
        %v1856 = vpop.f32.mrf.mxu0
        %1857 = vmatprep.mubr.bf16.mxu0 %v1674
        %1858 = vmatmul.mubr.bf16.gmra.mxu0 %v1673
        %v1859 = vpop.f32.mrf.mxu0
        %v1860 = vadd.f32 0.0, %v1859
        %v1861 = vpop.f32.mrf.mxu0
        %v1862 = vpop.f32.mrf.mxu0
        %v1863 = vadd.f32 0.0, %v1862
        %v1864 = vpop.f32.mrf.mxu0
        %1865 = vmatprep.mubr.bf16.mxu0 %v1676
        %1866 = vmatmul.mubr.bf16.gmra.mxu0 %v1675
        %v1867 = vpop.f32.mrf.mxu0
        %v1868 = vadd.f32 0.0, %v1867
        %v1869 = vpop.f32.mrf.mxu0
        %v1870 = vpop.f32.mrf.mxu0
        %v1871 = vadd.f32 0.0, %v1870
        %v1872 = vpop.f32.mrf.mxu0
        %1873 = vmatprep.mubr.bf16.mxu0 %v1678
        %1874 = vmatmul.mubr.bf16.gmra.mxu0 %v1677
        %v1875 = vpop.f32.mrf.mxu0
        %v1876 = vadd.f32 0.0, %v1875
        %v1877 = vpop.f32.mrf.mxu0
        %v1878 = vpop.f32.mrf.mxu0
        %v1879 = vadd.f32 0.0, %v1878
        %v1880 = vpop.f32.mrf.mxu0
        %1881 = vmatprep.mubr.bf16.mxu0 %v1680
        %1882 = vmatmul.mubr.bf16.gmra.mxu0 %v1679
        %v1883 = vpop.f32.mrf.mxu0
        %v1884 = vadd.f32 0.0, %v1883
        %v1885 = vpop.f32.mrf.mxu0
        %v1886 = vpop.f32.mrf.mxu0
        %v1887 = vadd.f32 0.0, %v1886
        %v1888 = vpop.f32.mrf.mxu0
        %1889 = vdwg.mxu0
        %v1890 = vadd.f32 %v1569, %v1828
        %v1891 = vadd.f32 %v1570, %v1831
        %v1892 = vadd.f32 %v1571, %v1836
        %v1893 = vadd.f32 %v1572, %v1839
        %v1894 = vadd.f32 %v1573, %v1844
        %v1895 = vadd.f32 %v1574, %v1847
        %v1896 = vadd.f32 %v1575, %v1852
        %v1897 = vadd.f32 %v1576, %v1855
        %v1898 = vadd.f32 %v1577, %v1860
        %v1899 = vadd.f32 %v1578, %v1863
        %v1900 = vadd.f32 %v1579, %v1868
        %v1901 = vadd.f32 %v1580, %v1871
        %v1902 = vadd.f32 %v1581, %v1876
        %v1903 = vadd.f32 %v1582, %v1879
        %v1904 = vadd.f32 %v1583, %v1884
        %v1905 = vadd.f32 %v1584, %v1887
        %vm1906 = vcmask 261120
        %1907 = vst.msk [vmem:[#allocation3] sm:$0xff] %vm1906, %v1890
        %1908 = vst.msk [vmem:[#allocation3 + $0x8] sm:$0xff] %vm1906, %v1891
        %1909 = vst.msk [vmem:[#allocation3 + $0x10] sm:$0xff] %vm1906, %v1892
        %1910 = vst.msk [vmem:[#allocation3 + $0x18] sm:$0xff] %vm1906, %v1893
        %1911 = vst.msk [vmem:[#allocation3 + $0x20] sm:$0xff] %vm1906, %v1894
        %1912 = vst.msk [vmem:[#allocation3 + $0x28] sm:$0xff] %vm1906, %v1895
        %1913 = vst.msk [vmem:[#allocation3 + $0x30] sm:$0xff] %vm1906, %v1896
        %1914 = vst.msk [vmem:[#allocation3 + $0x38] sm:$0xff] %vm1906, %v1897
        %1915 = vst.msk [vmem:[#allocation3 + $0x40] sm:$0xff] %vm1906, %v1898
        %1916 = vst.msk [vmem:[#allocation3 + $0x48] sm:$0xff] %vm1906, %v1899
        %1917 = vst.msk [vmem:[#allocation3 + $0x50] sm:$0xff] %vm1906, %v1900
        %1918 = vst.msk [vmem:[#allocation3 + $0x58] sm:$0xff] %vm1906, %v1901
        %1919 = vst.msk [vmem:[#allocation3 + $0x60] sm:$0xff] %vm1906, %v1902
        %1920 = vst.msk [vmem:[#allocation3 + $0x68] sm:$0xff] %vm1906, %v1903
        %1921 = vst.msk [vmem:[#allocation3 + $0x70] sm:$0xff] %vm1906, %v1904
        %1922 = vst.msk [vmem:[#allocation3 + $0x78] sm:$0xff] %vm1906, %v1905
        // Predicated region
        $region61: #{tpu_custom_call.1} parent=47 // pred_check
          %p1923 = pneg %p389
        $region62: #{tpu_custom_call.1} parent=47 // pred_check_branch
          %1925 = sbr.rel (%p1923) target = $region64
        $region63: #{tpu_custom_call.1} parent=47 // pred_region
          %v1926 = vld [vmem:[#allocation3] sm:$0xff]
          %v1927 = vld [vmem:[#allocation3 + $0x8] sm:$0xff]
          %v1928 = vld [vmem:[#allocation3 + $0x10] sm:$0xff]
          %v1929 = vld [vmem:[#allocation3 + $0x18] sm:$0xff]
          %v1930 = vld [vmem:[#allocation3 + $0x20] sm:$0xff]
          %v1931 = vld [vmem:[#allocation3 + $0x28] sm:$0xff]
          %v1932 = vld [vmem:[#allocation3 + $0x30] sm:$0xff]
          %v1933 = vld [vmem:[#allocation3 + $0x38] sm:$0xff]
          %v1934 = vld [vmem:[#allocation3 + $0x40] sm:$0xff]
          %v1935 = vld [vmem:[#allocation3 + $0x48] sm:$0xff]
          %v1936 = vld [vmem:[#allocation3 + $0x50] sm:$0xff]
          %v1937 = vld [vmem:[#allocation3 + $0x58] sm:$0xff]
          %v1938 = vld [vmem:[#allocation3 + $0x60] sm:$0xff]
          %v1939 = vld [vmem:[#allocation3 + $0x68] sm:$0xff]
          %v1940 = vld [vmem:[#allocation3 + $0x70] sm:$0xff]
          %v1941 = vld [vmem:[#allocation3 + $0x78] sm:$0xff]
          %v1942 = vsel %vm1906, %v1926, 0.0
          %1943 = vadd.xlane.f32.xlu0 %v1942
          %v1944 = vpop.xlane.xlu0 %1943
          %v1945 = vsel %vm1906, %v1927, 0.0
          %1946 = vadd.xlane.f32.xlu0 %v1945
          %v1947 = vpop.xlane.xlu0 %1946
          %v1948 = vsel %vm1906, %v1928, 0.0
          %1949 = vadd.xlane.f32.xlu0 %v1948
          %v1950 = vpop.xlane.xlu0 %1949
          %v1951 = vsel %vm1906, %v1929, 0.0
          %1952 = vadd.xlane.f32.xlu0 %v1951
          %v1953 = vpop.xlane.xlu0 %1952
          %v1954 = vsel %vm1906, %v1930, 0.0
          %1955 = vadd.xlane.f32.xlu0 %v1954
          %v1956 = vpop.xlane.xlu0 %1955
          %v1957 = vsel %vm1906, %v1931, 0.0
          %1958 = vadd.xlane.f32.xlu0 %v1957
          %v1959 = vpop.xlane.xlu0 %1958
          %v1960 = vsel %vm1906, %v1932, 0.0
          %1961 = vadd.xlane.f32.xlu0 %v1960
          %v1962 = vpop.xlane.xlu0 %1961
          %v1963 = vsel %vm1906, %v1933, 0.0
          %1964 = vadd.xlane.f32.xlu0 %v1963
          %v1965 = vpop.xlane.xlu0 %1964
          %v1966 = vsel %vm1906, %v1934, 0.0
          %1967 = vadd.xlane.f32.xlu0 %v1966
          %v1968 = vpop.xlane.xlu0 %1967
          %v1969 = vsel %vm1906, %v1935, 0.0
          %1970 = vadd.xlane.f32.xlu0 %v1969
          %v1971 = vpop.xlane.xlu0 %1970
          %v1972 = vsel %vm1906, %v1936, 0.0
          %1973 = vadd.xlane.f32.xlu0 %v1972
          %v1974 = vpop.xlane.xlu0 %1973
          %v1975 = vsel %vm1906, %v1937, 0.0
          %1976 = vadd.xlane.f32.xlu0 %v1975
          %v1977 = vpop.xlane.xlu0 %1976
          %v1978 = vsel %vm1906, %v1938, 0.0
          %1979 = vadd.xlane.f32.xlu0 %v1978
          %v1980 = vpop.xlane.xlu0 %1979
          %v1981 = vsel %vm1906, %v1939, 0.0
          %1982 = vadd.xlane.f32.xlu0 %v1981
          %v1983 = vpop.xlane.xlu0 %1982
          %v1984 = vsel %vm1906, %v1940, 0.0
          %1985 = vadd.xlane.f32.xlu0 %v1984
          %v1986 = vpop.xlane.xlu0 %1985
          %v1987 = vsel %vm1906, %v1941, 0.0
          %1988 = vadd.xlane.f32.xlu0 %v1987
          %v1989 = vpop.xlane.xlu0 %1988
          %v1990 = vrcp.pop 32.0
          %v1991 = vmul.f32 %v1944, %v1990
          %v1992 = vmul.f32 %v1947, %v1990
          %v1993 = vmul.f32 %v1950, %v1990
          %v1994 = vmul.f32 %v1953, %v1990
          %v1995 = vmul.f32 %v1956, %v1990
          %v1996 = vmul.f32 %v1959, %v1990
          %v1997 = vmul.f32 %v1962, %v1990
          %v1998 = vmul.f32 %v1965, %v1990
          %v1999 = vmul.f32 %v1968, %v1990
          %v2000 = vmul.f32 %v1971, %v1990
          %v2001 = vmul.f32 %v1974, %v1990
          %v2002 = vmul.f32 %v1977, %v1990
          %v2003 = vmul.f32 %v1980, %v1990
          %v2004 = vmul.f32 %v1983, %v1990
          %v2005 = vmul.f32 %v1986, %v1990
          %v2006 = vmul.f32 %v1989, %v1990
          %v2007 = vsub.f32 %v1926, %v1991
          %v2008 = vsub.f32 %v1927, %v1992
          %v2009 = vsub.f32 %v1928, %v1993
          %v2010 = vsub.f32 %v1929, %v1994
          %v2011 = vsub.f32 %v1930, %v1995
          %v2012 = vsub.f32 %v1931, %v1996
          %v2013 = vsub.f32 %v1932, %v1997
          %v2014 = vsub.f32 %v1933, %v1998
          %v2015 = vsub.f32 %v1934, %v1999
          %v2016 = vsub.f32 %v1935, %v2000
          %v2017 = vsub.f32 %v1936, %v2001
          %v2018 = vsub.f32 %v1937, %v2002
          %v2019 = vsub.f32 %v1938, %v2003
          %v2020 = vsub.f32 %v1939, %v2004
          %v2021 = vsub.f32 %v1940, %v2005
          %v2022 = vsub.f32 %v1941, %v2006
          %v2023 = vmul.f32 %v2007, %v2007
          %v2024 = vmul.f32 %v2008, %v2008
          %v2025 = vmul.f32 %v2009, %v2009
          %v2026 = vmul.f32 %v2010, %v2010
          %v2027 = vmul.f32 %v2011, %v2011
          %v2028 = vmul.f32 %v2012, %v2012
          %v2029 = vmul.f32 %v2013, %v2013
          %v2030 = vmul.f32 %v2014, %v2014
          %v2031 = vmul.f32 %v2015, %v2015
          %v2032 = vmul.f32 %v2016, %v2016
          %v2033 = vmul.f32 %v2017, %v2017
          %v2034 = vmul.f32 %v2018, %v2018
          %v2035 = vmul.f32 %v2019, %v2019
          %v2036 = vmul.f32 %v2020, %v2020
          %v2037 = vmul.f32 %v2021, %v2021
          %v2038 = vmul.f32 %v2022, %v2022
          %v2039 = vsel %vm1906, %v2023, 0.0
          %2040 = vadd.xlane.f32.xlu0 %v2039
          %v2041 = vpop.xlane.xlu0 %2040
          %v2042 = vsel %vm1906, %v2024, 0.0
          %2043 = vadd.xlane.f32.xlu0 %v2042
          %v2044 = vpop.xlane.xlu0 %2043
          %v2045 = vsel %vm1906, %v2025, 0.0
          %2046 = vadd.xlane.f32.xlu0 %v2045
          %v2047 = vpop.xlane.xlu0 %2046
          %v2048 = vsel %vm1906, %v2026, 0.0
          %2049 = vadd.xlane.f32.xlu0 %v2048
          %v2050 = vpop.xlane.xlu0 %2049
          %v2051 = vsel %vm1906, %v2027, 0.0
          %2052 = vadd.xlane.f32.xlu0 %v2051
          %v2053 = vpop.xlane.xlu0 %2052
          %v2054 = vsel %vm1906, %v2028, 0.0
          %2055 = vadd.xlane.f32.xlu0 %v2054
          %v2056 = vpop.xlane.xlu0 %2055
          %v2057 = vsel %vm1906, %v2029, 0.0
          %2058 = vadd.xlane.f32.xlu0 %v2057
          %v2059 = vpop.xlane.xlu0 %2058
          %v2060 = vsel %vm1906, %v2030, 0.0
          %2061 = vadd.xlane.f32.xlu0 %v2060
          %v2062 = vpop.xlane.xlu0 %2061
          %v2063 = vsel %vm1906, %v2031, 0.0
          %2064 = vadd.xlane.f32.xlu0 %v2063
          %v2065 = vpop.xlane.xlu0 %2064
          %v2066 = vsel %vm1906, %v2032, 0.0
          %2067 = vadd.xlane.f32.xlu0 %v2066
          %v2068 = vpop.xlane.xlu0 %2067
          %v2069 = vsel %vm1906, %v2033, 0.0
          %2070 = vadd.xlane.f32.xlu0 %v2069
          %v2071 = vpop.xlane.xlu0 %2070
          %v2072 = vsel %vm1906, %v2034, 0.0
          %2073 = vadd.xlane.f32.xlu0 %v2072
          %v2074 = vpop.xlane.xlu0 %2073
          %v2075 = vsel %vm1906, %v2035, 0.0
          %2076 = vadd.xlane.f32.xlu0 %v2075
          %v2077 = vpop.xlane.xlu0 %2076
          %v2078 = vsel %vm1906, %v2036, 0.0
          %2079 = vadd.xlane.f32.xlu0 %v2078
          %v2080 = vpop.xlane.xlu0 %2079
          %v2081 = vsel %vm1906, %v2037, 0.0
          %2082 = vadd.xlane.f32.xlu0 %v2081
          %v2083 = vpop.xlane.xlu0 %2082
          %v2084 = vsel %vm1906, %v2038, 0.0
          %2085 = vadd.xlane.f32.xlu0 %v2084
          %v2086 = vpop.xlane.xlu0 %2085
          %v2087 = vmul.f32 %v2041, %v1990
          %v2088 = vmul.f32 %v2044, %v1990
          %v2089 = vmul.f32 %v2047, %v1990
          %v2090 = vmul.f32 %v2050, %v1990
          %v2091 = vmul.f32 %v2053, %v1990
          %v2092 = vmul.f32 %v2056, %v1990
          %v2093 = vmul.f32 %v2059, %v1990
          %v2094 = vmul.f32 %v2062, %v1990
          %v2095 = vmul.f32 %v2065, %v1990
          %v2096 = vmul.f32 %v2068, %v1990
          %v2097 = vmul.f32 %v2071, %v1990
          %v2098 = vmul.f32 %v2074, %v1990
          %v2099 = vmul.f32 %v2077, %v1990
          %v2100 = vmul.f32 %v2080, %v1990
          %v2101 = vmul.f32 %v2083, %v1990
          %v2102 = vmul.f32 %v2086, %v1990
          %v2103 = vadd.f32 %v2087, 1e-06
          %v2104 = vadd.f32 %v2088, 1e-06
          %v2105 = vadd.f32 %v2089, 1e-06
          %v2106 = vadd.f32 %v2090, 1e-06
          %v2107 = vadd.f32 %v2091, 1e-06
          %v2108 = vadd.f32 %v2092, 1e-06
          %v2109 = vadd.f32 %v2093, 1e-06
          %v2110 = vadd.f32 %v2094, 1e-06
          %v2111 = vadd.f32 %v2095, 1e-06
          %v2112 = vadd.f32 %v2096, 1e-06
          %v2113 = vadd.f32 %v2097, 1e-06
          %v2114 = vadd.f32 %v2098, 1e-06
          %v2115 = vadd.f32 %v2099, 1e-06
          %v2116 = vadd.f32 %v2100, 1e-06
          %v2117 = vadd.f32 %v2101, 1e-06
          %v2118 = vadd.f32 %v2102, 1e-06
          %v2119 = vrsqrt.pop %v2103
          %v2120 = vrsqrt.pop %v2104
          %v2121 = vrsqrt.pop %v2105
          %v2122 = vrsqrt.pop %v2106
          %v2123 = vrsqrt.pop %v2107
          %v2124 = vrsqrt.pop %v2108
          %v2125 = vrsqrt.pop %v2109
          %v2126 = vrsqrt.pop %v2110
          %v2127 = vrsqrt.pop %v2111
          %v2128 = vrsqrt.pop %v2112
          %v2129 = vrsqrt.pop %v2113
          %v2130 = vrsqrt.pop %v2114
          %v2131 = vrsqrt.pop %v2115
          %v2132 = vrsqrt.pop %v2116
          %v2133 = vrsqrt.pop %v2117
          %v2134 = vrsqrt.pop %v2118
          %v2135 = vmul.f32 %v2007, %v2119
          %v2136 = vmul.f32 %v2008, %v2120
          %v2137 = vmul.f32 %v2009, %v2121
          %v2138 = vmul.f32 %v2010, %v2122
          %v2139 = vmul.f32 %v2011, %v2123
          %v2140 = vmul.f32 %v2012, %v2124
          %v2141 = vmul.f32 %v2013, %v2125
          %v2142 = vmul.f32 %v2014, %v2126
          %v2143 = vmul.f32 %v2015, %v2127
          %v2144 = vmul.f32 %v2016, %v2128
          %v2145 = vmul.f32 %v2017, %v2129
          %v2146 = vmul.f32 %v2018, %v2130
          %v2147 = vmul.f32 %v2019, %v2131
          %v2148 = vmul.f32 %v2020, %v2132
          %v2149 = vmul.f32 %v2021, %v2133
          %v2150 = vmul.f32 %v2022, %v2134
          %v2151 = vld [vmem:[%s4] sm:$0x1]
          %v2153 = vlaneseq
          %v2154 = vshrl.u32 %v2153, 7
          %v2155 = vsub.s32 0, %v2154
          %v2156 = vrot.slane %v2151, %v2155
          %v2158 = vmul.f32 %v2135, %v2156
          %v2159 = vmul.f32 %v2136, %v2156
          %v2160 = vmul.f32 %v2137, %v2156
          %v2161 = vmul.f32 %v2138, %v2156
          %v2162 = vmul.f32 %v2139, %v2156
          %v2163 = vmul.f32 %v2140, %v2156
          %v2164 = vmul.f32 %v2141, %v2156
          %v2165 = vmul.f32 %v2142, %v2156
          %v2166 = vmul.f32 %v2143, %v2156
          %v2167 = vmul.f32 %v2144, %v2156
          %v2168 = vmul.f32 %v2145, %v2156
          %v2169 = vmul.f32 %v2146, %v2156
          %v2170 = vmul.f32 %v2147, %v2156
          %v2171 = vmul.f32 %v2148, %v2156
          %v2172 = vmul.f32 %v2149, %v2156
          %v2173 = vmul.f32 %v2150, %v2156
          %v2174 = vld [vmem:[%s5] sm:$0x1]
          %v2176 = vlaneseq
          %v2177 = vshrl.u32 %v2176, 7
          %v2178 = vsub.s32 0, %v2177
          %v2179 = vrot.slane %v2174, %v2178
          %v2181 = vadd.f32 %v2158, %v2179
          %v2182 = vadd.f32 %v2159, %v2179
          %v2183 = vadd.f32 %v2160, %v2179
          %v2184 = vadd.f32 %v2161, %v2179
          %v2185 = vadd.f32 %v2162, %v2179
          %v2186 = vadd.f32 %v2163, %v2179
          %v2187 = vadd.f32 %v2164, %v2179
          %v2188 = vadd.f32 %v2165, %v2179
          %v2189 = vadd.f32 %v2166, %v2179
          %v2190 = vadd.f32 %v2167, %v2179
          %v2191 = vadd.f32 %v2168, %v2179
          %v2192 = vadd.f32 %v2169, %v2179
          %v2193 = vadd.f32 %v2170, %v2179
          %v2194 = vadd.f32 %v2171, %v2179
          %v2195 = vadd.f32 %v2172, %v2179
          %v2196 = vadd.f32 %v2173, %v2179
          %v2197 = vpack.c.bf16 %v2182, %v2181
          %v2198 = vpack.c.bf16 %v2184, %v2183
          %v2199 = vpack.c.bf16 %v2186, %v2185
          %v2200 = vpack.c.bf16 %v2188, %v2187
          %v2201 = vpack.c.bf16 %v2190, %v2189
          %v2202 = vpack.c.bf16 %v2192, %v2191
          %v2203 = vpack.c.bf16 %v2194, %v2193
          %v2204 = vpack.c.bf16 %v2196, %v2195
          %v2205 = vld [vmem:[%s3] sm:$0xf]
          %v2206 = vld [vmem:[%s3 + $0x4] sm:$0xf]
          %v2207 = vld [vmem:[%s3 + $0x8] sm:$0xf]
          %v2208 = vld [vmem:[%s3 + $0xc] sm:$0xf]
          %v2213 = vunpack.c.l.b16 %v2205
          %v2214 = vunpack.c.l.b16 %v2206
          %v2215 = vunpack.c.l.b16 %v2207
          %v2216 = vunpack.c.l.b16 %v2208
          %v2217 = vpack.c.b16 %v2214, %v2213
          %v2218 = vpack.c.b16 %v2216, %v2215
          %v2222 = vsel %vm1906, %v2197, 0
          %v2225 = vsel %vm1906, %v2198, 0
          %v2228 = vsel %vm1906, %v2199, 0
          %v2231 = vsel %vm1906, %v2200, 0
          %v2234 = vsel %vm1906, %v2201, 0
          %v2237 = vsel %vm1906, %v2202, 0
          %v2240 = vsel %vm1906, %v2203, 0
          %v2243 = vsel %vm1906, %v2204, 0
          %2245 = vmatprep.subr.bf16.mxu0 0
          %2246 = vmatpush1.bf16.msra.mxu0 0
          %2247 = vmatprep.subr.bf16.mxu0 0
          %2248 = vmatpush1.bf16.msra.mxu0 0
          %2249 = vmatprep.subr.bf16.mxu0 0
          %2250 = vmatpush1.bf16.msra.mxu0 0
          %2251 = vmatprep.subr.bf16.mxu0 0
          %2252 = vmatpush1.bf16.msra.mxu0 0
          %2253 = vmatprep.subr.bf16.mxu0 0
          %2254 = vmatpush1.bf16.msra.mxu0 0
          %2255 = vmatprep.subr.bf16.mxu0 0
          %2256 = vmatpush1.bf16.msra.mxu0 0
          %2257 = vmatprep.subr.bf16.mxu0 0
          %2258 = vmatpush1.bf16.msra.mxu0 %v2218
          %2259 = vmatprep.subr.bf16.mxu0 0
          %2260 = vmatpush1.bf16.msra.mxu0 %v2217
          %2261 = vmatprep.subr.bf16.mxu0 0
          %2262 = vmatpush2.bf16.msra.mxu0 0
          %2263 = vmatprep.subr.bf16.mxu0 0
          %2264 = vmatpush2.bf16.msra.mxu0 0
          %2265 = vmatprep.subr.bf16.mxu0 0
          %2266 = vmatpush2.bf16.msra.mxu0 0
          %2267 = vmatprep.subr.bf16.mxu0 0
          %2268 = vmatpush2.bf16.msra.mxu0 0
          %2269 = vmatprep.subr.bf16.mxu0 0
          %2270 = vmatpush2.bf16.msra.mxu0 0
          %2271 = vmatprep.subr.bf16.mxu0 0
          %2272 = vmatpush2.bf16.msra.mxu0 0
          %2273 = vmatprep.subr.bf16.mxu0 0
          %2274 = vmatpush2.bf16.msra.mxu0 0
          %2275 = vmatprep.subr.bf16.mxu0 0
          %2276 = vmatpush2.bf16.msra.mxu0 0
          %2277 = vmatprep.mubr.bf16.mxu0 0
          %2278 = vmatmul.mubr.bf16.gmra.mxu0 %v2222
          %v2279 = vpop.f32.mrf.mxu0
          %v2280 = vadd.f32 0.0, %v2279
          %v2281 = vpop.f32.mrf.mxu0
          %v2282 = vpop.f32.mrf.mxu0
          %v2283 = vadd.f32 0.0, %v2282
          %v2284 = vpop.f32.mrf.mxu0
          %2285 = vmatprep.mubr.bf16.mxu0 0
          %2286 = vmatmul.mubr.bf16.gmra.mxu0 %v2225
          %v2287 = vpop.f32.mrf.mxu0
          %v2288 = vadd.f32 0.0, %v2287
          %v2289 = vpop.f32.mrf.mxu0
          %v2290 = vpop.f32.mrf.mxu0
          %v2291 = vadd.f32 0.0, %v2290
          %v2292 = vpop.f32.mrf.mxu0
          %2293 = vmatprep.mubr.bf16.mxu0 0
          %2294 = vmatmul.mubr.bf16.gmra.mxu0 %v2228
          %v2295 = vpop.f32.mrf.mxu0
          %v2296 = vadd.f32 0.0, %v2295
          %v2297 = vpop.f32.mrf.mxu0
          %v2298 = vpop.f32.mrf.mxu0
          %v2299 = vadd.f32 0.0, %v2298
          %v2300 = vpop.f32.mrf.mxu0
          %2301 = vmatprep.mubr.bf16.mxu0 0
          %2302 = vmatmul.mubr.bf16.gmra.mxu0 %v2231
          %v2303 = vpop.f32.mrf.mxu0
          %v2304 = vadd.f32 0.0, %v2303
          %v2305 = vpop.f32.mrf.mxu0
          %v2306 = vpop.f32.mrf.mxu0
          %v2307 = vadd.f32 0.0, %v2306
          %v2308 = vpop.f32.mrf.mxu0
          %2309 = vmatprep.mubr.bf16.mxu0 0
          %2310 = vmatmul.mubr.bf16.gmra.mxu0 %v2234
          %v2311 = vpop.f32.mrf.mxu0
          %v2312 = vadd.f32 0.0, %v2311
          %v2313 = vpop.f32.mrf.mxu0
          %v2314 = vpop.f32.mrf.mxu0
          %v2315 = vadd.f32 0.0, %v2314
          %v2316 = vpop.f32.mrf.mxu0
          %2317 = vmatprep.mubr.bf16.mxu0 0
          %2318 = vmatmul.mubr.bf16.gmra.mxu0 %v2237
          %v2319 = vpop.f32.mrf.mxu0
          %v2320 = vadd.f32 0.0, %v2319
          %v2321 = vpop.f32.mrf.mxu0
          %v2322 = vpop.f32.mrf.mxu0
          %v2323 = vadd.f32 0.0, %v2322
          %v2324 = vpop.f32.mrf.mxu0
          %2325 = vmatprep.mubr.bf16.mxu0 0
          %2326 = vmatmul.mubr.bf16.gmra.mxu0 %v2240
          %v2327 = vpop.f32.mrf.mxu0
          %v2328 = vadd.f32 0.0, %v2327
          %v2329 = vpop.f32.mrf.mxu0
          %v2330 = vpop.f32.mrf.mxu0
          %v2331 = vadd.f32 0.0, %v2330
          %v2332 = vpop.f32.mrf.mxu0
          %2333 = vmatprep.mubr.bf16.mxu0 0
          %2334 = vmatmul.mubr.bf16.gmra.mxu0 %v2243
          %v2335 = vpop.f32.mrf.mxu0
          %v2336 = vadd.f32 0.0, %v2335
          %v2337 = vpop.f32.mrf.mxu0
          %v2338 = vpop.f32.mrf.mxu0
          %v2339 = vadd.f32 0.0, %v2338
          %v2340 = vpop.f32.mrf.mxu0
          %2341 = vdwg.mxu0
          %v2342 = vld [vmem:[#allocation2] sm:$0xff]
          %v2343 = vld [vmem:[#allocation2 + $0x8] sm:$0xff]
          %v2344 = vld [vmem:[#allocation2 + $0x10] sm:$0xff]
          %v2345 = vld [vmem:[#allocation2 + $0x18] sm:$0xff]
          %v2346 = vld [vmem:[#allocation2 + $0x20] sm:$0xff]
          %v2347 = vld [vmem:[#allocation2 + $0x28] sm:$0xff]
          %v2348 = vld [vmem:[#allocation2 + $0x30] sm:$0xff]
          %v2349 = vld [vmem:[#allocation2 + $0x38] sm:$0xff]
          %v2350 = vld [vmem:[#allocation2 + $0x40] sm:$0xff]
          %v2351 = vld [vmem:[#allocation2 + $0x48] sm:$0xff]
          %v2352 = vld [vmem:[#allocation2 + $0x50] sm:$0xff]
          %v2353 = vld [vmem:[#allocation2 + $0x58] sm:$0xff]
          %v2354 = vld [vmem:[#allocation2 + $0x60] sm:$0xff]
          %v2355 = vld [vmem:[#allocation2 + $0x68] sm:$0xff]
          %v2356 = vld [vmem:[#allocation2 + $0x70] sm:$0xff]
          %v2357 = vld [vmem:[#allocation2 + $0x78] sm:$0xff]
          %v2358 = vadd.f32 %v2342, %v2280
          %v2359 = vadd.f32 %v2343, %v2283
          %v2360 = vadd.f32 %v2344, %v2288
          %v2361 = vadd.f32 %v2345, %v2291
          %v2362 = vadd.f32 %v2346, %v2296
          %v2363 = vadd.f32 %v2347, %v2299
          %v2364 = vadd.f32 %v2348, %v2304
          %v2365 = vadd.f32 %v2349, %v2307
          %v2366 = vadd.f32 %v2350, %v2312
          %v2367 = vadd.f32 %v2351, %v2315
          %v2368 = vadd.f32 %v2352, %v2320
          %v2369 = vadd.f32 %v2353, %v2323
          %v2370 = vadd.f32 %v2354, %v2328
          %v2371 = vadd.f32 %v2355, %v2331
          %v2372 = vadd.f32 %v2356, %v2336
          %v2373 = vadd.f32 %v2357, %v2339
          %v2374 = vmul.f32 %v2358, 0.5
          %v2375 = vmul.f32 %v2359, 0.5
          %v2376 = vmul.f32 %v2360, 0.5
          %v2377 = vmul.f32 %v2361, 0.5
          %v2378 = vmul.f32 %v2362, 0.5
          %v2379 = vmul.f32 %v2363, 0.5
          %v2380 = vmul.f32 %v2364, 0.5
          %v2381 = vmul.f32 %v2365, 0.5
          %v2382 = vmul.f32 %v2366, 0.5
          %v2383 = vmul.f32 %v2367, 0.5
          %v2384 = vmul.f32 %v2368, 0.5
          %v2385 = vmul.f32 %v2369, 0.5
          %v2386 = vmul.f32 %v2370, 0.5
          %v2387 = vmul.f32 %v2371, 0.5
          %v2388 = vmul.f32 %v2372, 0.5
          %v2389 = vmul.f32 %v2373, 0.5
          %v2390 = vld [vmem:[%s6] sm:$0x1]
          %v2392 = vlaneseq
          %v2393 = vshrl.u32 %v2392, 7
          %v2394 = vsub.s32 0, %v2393
          %v2395 = vrot.slane %v2390, %v2394
          %v2397 = vadd.f32 %v2374, %v2395
          %v2398 = vadd.f32 %v2375, %v2395
          %v2399 = vadd.f32 %v2376, %v2395
          %v2400 = vadd.f32 %v2377, %v2395
          %v2401 = vadd.f32 %v2378, %v2395
          %v2402 = vadd.f32 %v2379, %v2395
          %v2403 = vadd.f32 %v2380, %v2395
          %v2404 = vadd.f32 %v2381, %v2395
          %v2405 = vadd.f32 %v2382, %v2395
          %v2406 = vadd.f32 %v2383, %v2395
          %v2407 = vadd.f32 %v2384, %v2395
          %v2408 = vadd.f32 %v2385, %v2395
          %v2409 = vadd.f32 %v2386, %v2395
          %v2410 = vadd.f32 %v2387, %v2395
          %v2411 = vadd.f32 %v2388, %v2395
          %v2412 = vadd.f32 %v2389, %v2395
          %2413 = vst [vmem:[%s377] sm:$0xff] %v2397
          %2414 = vst [vmem:[%s377 + $0x8] sm:$0xff] %v2398
          %2415 = vst [vmem:[%s377 + $0x10] sm:$0xff] %v2399
          %2416 = vst [vmem:[%s377 + $0x18] sm:$0xff] %v2400
          %2417 = vst [vmem:[%s377 + $0x20] sm:$0xff] %v2401
          %2418 = vst [vmem:[%s377 + $0x28] sm:$0xff] %v2402
          %2419 = vst [vmem:[%s377 + $0x30] sm:$0xff] %v2403
          %2420 = vst [vmem:[%s377 + $0x38] sm:$0xff] %v2404
          %2421 = vst [vmem:[%s377 + $0x40] sm:$0xff] %v2405
          %2422 = vst [vmem:[%s377 + $0x48] sm:$0xff] %v2406
          %2423 = vst [vmem:[%s377 + $0x50] sm:$0xff] %v2407
          %2424 = vst [vmem:[%s377 + $0x58] sm:$0xff] %v2408
          %2425 = vst [vmem:[%s377 + $0x60] sm:$0xff] %v2409
          %2426 = vst [vmem:[%s377 + $0x68] sm:$0xff] %v2410
          %2427 = vst [vmem:[%s377 + $0x70] sm:$0xff] %v2411
          %2428 = vst [vmem:[%s377 + $0x78] sm:$0xff] %v2412
        $region64: #{tpu_custom_call.1} parent=47 // pred_fallthru
          _
        %s2429 = sand.u32 %s209, 1
        %s2430 = scalar_lea.sflag [#allocation6], %s2429
        %s2431 = sand.u32 %s209, 1
        %s2432 = smul.addr %s2431, 128
        %s2433 = scalar_lea.vmem [#allocation9], %s2432
        // Predicated region
        $region65: #{tpu_custom_call.1} parent=47 // pred_check
          %p2434 = pneg %p219
        $region66: #{tpu_custom_call.1} parent=47 // pred_check_branch
          %2436 = sbr.rel (%p2434) target = $region68
        $region67: #{tpu_custom_call.1} parent=47 // pred_region
          %s2437 = smul.u32 16, %s29
          %s2439 = ssub.s32 2048, 2048
          %2440 = vsyncadd %s2430, %s2439
          %s2441 = smul.addr %s2437, 128
          %s2442 = scalar_lea.hbm %s7, %s2441
          %s2443 = sshll.u32 %s2433, 4
          %s2444 = int_to_ptr.vmem [resolvable:$true] %s2443
          %2449 = dma.vmem_to_hbm [thread:$0]  %s2444, 2048, %s2442, %s2430, 128, 128, 8
        $region68: #{tpu_custom_call.1} parent=47 // pred_fallthru
          _
      $region48: #{tpu_custom_call.1} parent=5 // pred_fallthru
        _
      %p2450 = scmp.le.s32.totalorder 2, %s20
      // Predicated region
      $region69: #{tpu_custom_call.1} parent=5 // pred_check
        %p2451 = pneg %p2450
      $region70: #{tpu_custom_call.1} parent=5 // pred_check_branch
        %2453 = sbr.rel (%p2451) target = $region72
      $region71: #{tpu_custom_call.1} parent=5 // pred_region
        %s2454 = ssub.s32 %s20, 2
        // Predicated region
        $region73: #{tpu_custom_call.1} parent=71 // pred_check
          %p2455 = pneg %p225
        $region74: #{tpu_custom_call.1} parent=71 // pred_check_branch
          %2457 = sbr.rel (%p2455) target = $region76
        $region75: #{tpu_custom_call.1} parent=71 // pred_region
          %s2458 = sand.u32 %s210, 1
          %s2459 = scalar_lea.sflag [#allocation6], %s2458
          %s2460 = sand.u32 %s210, 1
          %s2461 = smul.addr %s2460, 128
          %s2462 = scalar_lea.vmem [#allocation9], %s2461
          %2463 = dma.done %s2459, 2048
        $region76: #{tpu_custom_call.1} parent=71 // pred_fallthru
          _
      $region72: #{tpu_custom_call.1} parent=5 // pred_fallthru
        _
    $region6: #{tpu_custom_call.1} parent=1 // loop_footer
      %s24 = sadd.s32 1, %s20
    $region7: #{tpu_custom_call.1} parent=1 // loop_footer_branch
      %19 = sbr.rel target = $region3
    $region8: #{tpu_custom_call.1} parent=1 // loop_exit
      _
    %2464 = vsyncpa [#allocation5], 1
    %s2465 = scalar_lea.sflag [#allocation5], 1
    %2466 = vsyncpa %s2465, 1
    %2467 = vsyncpa [#allocation8], 1
    %2468 = vsyncpa [#allocation6], 1
    %s2469 = scalar_lea.sflag [#allocation6], 1
    %2470 = vsyncpa %s2469, 1

</llo_original>
